<compile_context>
chip_gen: v6e
topology: v6e:2x2x1
jax: 0.10.0
libtpu: 0.0.40
codegen_flags: <defaults>
</compile_context>

<pallas_src>
import jax
import jax.numpy as jnp
from jax.experimental import pallas as pl
from jax.experimental.pallas import tpu as pltpu

LANE = 128  # vreg lane width


def _round_up(n: int, m: int) -> int:
    return ((n + m - 1) // m) * m


def _device_kind() -> str:
    try:
        return jax.devices()[0].device_kind.lower()
    except Exception:
        return ""


def _tpu_num_cores() -> int:
    # v7x exposes 2 TensorCores per chip; v5e/v6e have 1.
    return 2 if "v7" in _device_kind() else 1


def _default_compute_dtype():
    # bf16 MXU/VPU path only pays off on v6e/v7x; v5e stays f32 (review).
    kind = _device_kind()
    return jnp.bfloat16 if ("v6" in kind or "v7" in kind) else jnp.float32


def _choose_tiling(batch: int, num_cores: int, max_tile_b: int = 2048):
    """Fewest grid steps (a multiple of num_cores) with tile_b <= max_tile_b."""
    steps = num_cores
    while _round_up(pl.cdiv(batch, steps), 8) > max_tile_b:
        steps += num_cores
    tile_b = _round_up(pl.cdiv(batch, steps), 8)
    steps = pl.cdiv(batch, tile_b)
    if steps == 1:
        tile_b = batch  # full-array block: always layout-legal, no ragged tail
    return tile_b, steps


def dqn_kernel(x_ref, w1_ref, b1_ref, w2_ref, b2_ref, w3_ref, b3_ref, o_ref):
    # One batch tile: 3 MXU matmuls + VPU bias/ReLU, fully fused in VMEM.
    # MXU inputs use the weight dtype (f32 or bf16); accum + epilogue are f32.
    cdt = w1_ref.dtype
    x = x_ref[...]
    if x.dtype != cdt:          # trace-time branch; no-op on matched dtypes
        x = x.astype(cdt)
    h1 = jnp.dot(x, w1_ref[...], preferred_element_type=jnp.float32) + b1_ref[...]
    h1 = jnp.maximum(h1, 0.0)
    if cdt != jnp.float32:
        h1 = h1.astype(cdt)
    h2 = jnp.dot(h1, w2_ref[...], preferred_element_type=jnp.float32) + b2_ref[...]
    h2 = jnp.maximum(h2, 0.0)
    if cdt != jnp.float32:
        h2 = h2.astype(cdt)
    out = jnp.dot(h2, w3_ref[...], preferred_element_type=jnp.float32) + b3_ref[...]
    o_ref[...] = out.astype(o_ref.dtype)


def init_dqn_params(key, state_size, action_size, hidden=64):
    """PyTorch nn.Linear default init: U(-1/sqrt(fan_in), 1/sqrt(fan_in)).
    Weights stored (in, out) = transpose of PyTorch's (out, in)."""
    ks = jax.random.split(key, 6)

    def linear(kw, kb, fan_in, fan_out):
        bound = 1.0 / float(fan_in) ** 0.5
        w = jax.random.uniform(kw, (fan_in, fan_out), jnp.float32, -bound, bound)
        b = jax.random.uniform(kb, (1, fan_out), jnp.float32, -bound, bound)
        return w, b

    w1, b1 = linear(ks[0], ks[1], state_size, hidden)
    w2, b2 = linear(ks[2], ks[3], hidden, hidden)
    w3, b3 = linear(ks[4], ks[5], hidden, action_size)
    return (w1, b1, w2, b2, w3, b3)


def pad_params(params, weights_dtype=jnp.float32):
    """Zero-pad only the hidden dim to a multiple of 128 (exact through
    bias-add and ReLU).  The action dim stays unpadded: the final output is
    written at its true width (no write amplification, no wrapper slice).
    Biases stay f32 because the epilogue is always f32."""
    w1, b1, w2, b2, w3, b3 = params
    hidden = w1.shape[1]
    dh = _round_up(hidden, LANE) - hidden

    w1p = jnp.pad(w1, ((0, 0), (0, dh))).astype(weights_dtype)
    b1p = jnp.pad(b1, ((0, 0), (0, dh))).astype(jnp.float32)
    w2p = jnp.pad(w2, ((0, dh), (0, dh))).astype(weights_dtype)
    b2p = jnp.pad(b2, ((0, 0), (0, dh))).astype(jnp.float32)
    w3p = jnp.pad(w3, ((0, dh), (0, 0))).astype(weights_dtype)
    b3p = b3.astype(jnp.float32)
    return (w1p, b1p, w2p, b2p, w3p, b3p)


def dqn_forward(x, padded_params, *, max_tile_b=2048):
    """Batched DQN forward. x: (batch, state_size) f32 -> (batch, action_size) f32."""
    w1, b1, w2, b2, w3, b3 = padded_params
    batch, state_size = x.shape
    hp = w1.shape[1]            # padded hidden (128)
    act = w3.shape[1]           # true action dim (unpadded)

    # bf16 path: present x to the kernel already in bf16 (halves activation DMA).
    if w1.dtype == jnp.bfloat16 and x.dtype != jnp.bfloat16:
        x = x.astype(jnp.bfloat16)

    tile_b, num_tiles = _choose_tiling(batch, _tpu_num_cores(), max_tile_b)

    bytes_in = x.size * x.dtype.itemsize + sum(
        int(p.size) * p.dtype.itemsize for p in (w1, b1, w2, b2, w3, b3))
    bytes_out = batch * act * 4
    cost = pl.CostEstimate(
        flops=2 * batch * (state_size * hp + hp * hp + hp * act),
        transcendentals=0,
        bytes_accessed=int(bytes_in + bytes_out),
    )

    out = pl.pallas_call(
        dqn_kernel,
        out_shape=jax.ShapeDtypeStruct((batch, act), jnp.float32),
        grid=(num_tiles,),
        in_specs=[
            # activations: one batch tile per grid step (auto-pipelined;
            # a ragged tail block is handled by Pallas, no wrapper pad).
            pl.BlockSpec((tile_b, state_size), lambda i: (i, 0)),
            # weights / biases: constant block index -> loaded once, VMEM-resident
            pl.BlockSpec((state_size, hp), lambda i: (0, 0)),
            pl.BlockSpec((1, hp), lambda i: (0, 0)),
            pl.BlockSpec((hp, hp), lambda i: (0, 0)),
            pl.BlockSpec((1, hp), lambda i: (0, 0)),
            pl.BlockSpec((hp, act), lambda i: (0, 0)),
            pl.BlockSpec((1, act), lambda i: (0, 0)),
        ],
        # true-width output: no padded columns -> no 32x HBM write
        # amplification and no wrapper-side slice copy.
        out_specs=pl.BlockSpec((tile_b, act), lambda i: (i, 0)),
        compiler_params=pltpu.CompilerParams(
            dimension_semantics=("parallel",),
        ),
        cost_estimate=cost,
    )(x, w1, b1, w2, b2, w3, b3)

    return out


def _reference(x, params):
    w1, b1, w2, b2, w3, b3 = params
    h = jnp.maximum(x @ w1 + b1, 0.0)
    h = jnp.maximum(h @ w2 + b2, 0.0)
    return h @ w3 + b3


if __name__ == "__main__":
    key = jax.random.PRNGKey(0)
    k_x, k_p = jax.random.split(key)

    # DQN-shaped problem; batch large enough that the call is not launch-bound.
    batch = 512
    state_size = 16
    action_size = 4

    x = jax.random.normal(k_x, (batch, state_size), jnp.float32)
    params = init_dqn_params(k_p, state_size, action_size)
    ref = _reference(x, params)

    fwd = jax.jit(dqn_forward)

    # f32 path: numerically identical to the PyTorch module (default on v5e).
    out_f32 = jax.block_until_ready(fwd(x, pad_params(params, jnp.float32)))
    assert out_f32.shape == (batch, action_size)
    assert jnp.allclose(out_f32, ref, atol=1e-5, rtol=1e-5)

    # bf16 weight/activation path, f32 accumulation: only where it pays off
    # (v6e / v7x); skipped on v5e per review (no native bf16 VPU there).
    if _default_compute_dtype() == jnp.bfloat16:
        out_bf16 = jax.block_until_ready(fwd(x, pad_params(params, jnp.bfloat16)))
        assert out_bf16.shape == (batch, action_size)
        assert jnp.allclose(out_bf16, ref, atol=1e-1, rtol=1e-1)

    # TODO(synk): for a full DQN training step, fuse the action-dim reduction
    # (max-Q / argmax / gather(Q, a)) and the TD-target elementwise math into
    # this kernel's epilogue so the HBM output shrinks to (batch, 1).
    print("KERNEL_OK")
</pallas_src>

<mosaic_0001>
module attributes {stable_mosaic.version = 11 : i64} {
  func.func @dqn_kernel(%arg0: i32, %arg1: memref<512x16xf32, #tpu.memory_space<vmem>>, %arg2: memref<16x128xf32, #tpu.memory_space<vmem>>, %arg3: memref<1x128xf32, #tpu.memory_space<vmem>>, %arg4: memref<128x128xf32, #tpu.memory_space<vmem>>, %arg5: memref<1x128xf32, #tpu.memory_space<vmem>>, %arg6: memref<128x4xf32, #tpu.memory_space<vmem>>, %arg7: memref<1x4xf32, #tpu.memory_space<vmem>>, %arg8: memref<512x4xf32, #tpu.memory_space<vmem>>) attributes {dimension_semantics = [#tpu.dimension_semantics<parallel>], iteration_bounds = array<i64: 1>, scalar_prefetch = 0 : i64, scratch_operands = 0 : i64, tpu.core_type = #tpu.core_type<tc>, window_params = [{transform_indices = @transform_0, window_bounds = array<i64: 512, 16>}, {pipeline_mode = #tpu.pipeline_mode<synchronous>, transform_indices = @transform_1, window_bounds = array<i64: 16, 128>}, {pipeline_mode = #tpu.pipeline_mode<synchronous>, transform_indices = @transform_2, window_bounds = array<i64: 1, 128>}, {pipeline_mode = #tpu.pipeline_mode<synchronous>, transform_indices = @transform_3, window_bounds = array<i64: 128, 128>}, {pipeline_mode = #tpu.pipeline_mode<synchronous>, transform_indices = @transform_4, window_bounds = array<i64: 1, 128>}, {pipeline_mode = #tpu.pipeline_mode<synchronous>, transform_indices = @transform_5, window_bounds = array<i64: 128, 4>}, {pipeline_mode = #tpu.pipeline_mode<synchronous>, transform_indices = @transform_6, window_bounds = array<i64: 1, 4>}, {transform_indices = @transform_7, window_bounds = array<i64: 512, 4>}]} {
    %c0 = arith.constant 0 : index
    %c0_0 = arith.constant 0 : index
    %0 = vector.load %arg1[%c0, %c0_0] : memref<512x16xf32, #tpu.memory_space<vmem>>, vector<512x16xf32>
    %c0_1 = arith.constant 0 : index
    %c0_2 = arith.constant 0 : index
    %1 = vector.load %arg2[%c0_1, %c0_2] : memref<16x128xf32, #tpu.memory_space<vmem>>, vector<16x128xf32>
    %cst = arith.constant dense<0.000000e+00> : vector<512x128xf32>
    %2 = tpu.matmul %0, %1, %cst {dimension_numbers = #tpu.dot_dimension_numbers<[1], [0], [0], [1], [0, 0, 1, 1], [], []>} : vector<512x16xf32>, vector<16x128xf32>, vector<512x128xf32> -> vector<512x128xf32>
    %c0_3 = arith.constant 0 : index
    %c0_4 = arith.constant 0 : index
    %3 = vector.load %arg3[%c0_3, %c0_4] : memref<1x128xf32, #tpu.memory_space<vmem>>, vector<1x128xf32>
    %4 = vector.broadcast %3 : vector<1x128xf32> to vector<512x128xf32>
    %5 = arith.addf %2, %4 : vector<512x128xf32>
    %cst_5 = arith.constant 0.000000e+00 : f32
    %6 = vector.broadcast %cst_5 : f32 to vector<512x128xf32>
    %7 = arith.maximumf %5, %6 : vector<512x128xf32>
    %c0_6 = arith.constant 0 : index
    %c0_7 = arith.constant 0 : index
    %8 = vector.load %arg4[%c0_6, %c0_7] : memref<128x128xf32, #tpu.memory_space<vmem>>, vector<128x128xf32>
    %cst_8 = arith.constant dense<0.000000e+00> : vector<512x128xf32>
    %9 = tpu.matmul %7, %8, %cst_8 {dimension_numbers = #tpu.dot_dimension_numbers<[1], [0], [0], [1], [0, 0, 1, 1], [], []>} : vector<512x128xf32>, vector<128x128xf32>, vector<512x128xf32> -> vector<512x128xf32>
    %c0_9 = arith.constant 0 : index
    %c0_10 = arith.constant 0 : index
    %10 = vector.load %arg5[%c0_9, %c0_10] : memref<1x128xf32, #tpu.memory_space<vmem>>, vector<1x128xf32>
    %11 = vector.broadcast %10 : vector<1x128xf32> to vector<512x128xf32>
    %12 = arith.addf %9, %11 : vector<512x128xf32>
    %cst_11 = arith.constant 0.000000e+00 : f32
    %13 = vector.broadcast %cst_11 : f32 to vector<512x128xf32>
    %14 = arith.maximumf %12, %13 : vector<512x128xf32>
    %c0_12 = arith.constant 0 : index
    %c0_13 = arith.constant 0 : index
    %15 = vector.load %arg6[%c0_12, %c0_13] : memref<128x4xf32, #tpu.memory_space<vmem>>, vector<128x4xf32>
    %cst_14 = arith.constant dense<0.000000e+00> : vector<512x4xf32>
    %16 = tpu.matmul %14, %15, %cst_14 {dimension_numbers = #tpu.dot_dimension_numbers<[1], [0], [0], [1], [0, 0, 1, 1], [], []>} : vector<512x128xf32>, vector<128x4xf32>, vector<512x4xf32> -> vector<512x4xf32>
    %c0_15 = arith.constant 0 : index
    %c0_16 = arith.constant 0 : index
    %17 = vector.load %arg7[%c0_15, %c0_16] : memref<1x4xf32, #tpu.memory_space<vmem>>, vector<1x4xf32>
    %18 = vector.broadcast %17 : vector<1x4xf32> to vector<512x4xf32>
    %19 = arith.addf %16, %18 : vector<512x4xf32>
    %c0_17 = arith.constant 0 : index
    %c0_18 = arith.constant 0 : index
    %20 = vector.load %arg8[%c0_17, %c0_18] : memref<512x4xf32, #tpu.memory_space<vmem>>, vector<512x4xf32>
    tpu.vector_store %arg8[%c0_17, %c0_18], %19 {strides = array<i32>} : memref<512x4xf32, #tpu.memory_space<vmem>>, vector<512x4xf32>,
    return
  }
  func.func @transform_0(%arg0: i32) -> (i32, i32) {
    %c0_i32 = arith.constant 0 : i32
    %c0_i32_0 = arith.constant 0 : i32
    return %arg0, %c0_i32 : i32, i32
  }
  func.func @transform_1(%arg0: i32) -> (i32, i32) {
    %c0_i32 = arith.constant 0 : i32
    %c0_i32_0 = arith.constant 0 : i32
    %c0_i32_1 = arith.constant 0 : i32
    return %c0_i32, %c0_i32_0 : i32, i32
  }
  func.func @transform_2(%arg0: i32) -> (i32, i32) {
    %c0_i32 = arith.constant 0 : i32
    %c0_i32_0 = arith.constant 0 : i32
    %c0_i32_1 = arith.constant 0 : i32
    return %c0_i32, %c0_i32_0 : i32, i32
  }
  func.func @transform_3(%arg0: i32) -> (i32, i32) {
    %c0_i32 = arith.constant 0 : i32
    %c0_i32_0 = arith.constant 0 : i32
    %c0_i32_1 = arith.constant 0 : i32
    return %c0_i32, %c0_i32_0 : i32, i32
  }
  func.func @transform_4(%arg0: i32) -> (i32, i32) {
    %c0_i32 = arith.constant 0 : i32
    %c0_i32_0 = arith.constant 0 : i32
    %c0_i32_1 = arith.constant 0 : i32
    return %c0_i32, %c0_i32_0 : i32, i32
  }
  func.func @transform_5(%arg0: i32) -> (i32, i32) {
    %c0_i32 = arith.constant 0 : i32
    %c0_i32_0 = arith.constant 0 : i32
    %c0_i32_1 = arith.constant 0 : i32
    return %c0_i32, %c0_i32_0 : i32, i32
  }
  func.func @transform_6(%arg0: i32) -> (i32, i32) {
    %c0_i32 = arith.constant 0 : i32
    %c0_i32_0 = arith.constant 0 : i32
    %c0_i32_1 = arith.constant 0 : i32
    return %c0_i32, %c0_i32_0 : i32, i32
  }
  func.func @transform_7(%arg0: i32) -> (i32, i32) {
    %c0_i32 = arith.constant 0 : i32
    %c0_i32_0 = arith.constant 0 : i32
    return %arg0, %c0_i32 : i32, i32
  }
}

</mosaic_0001>

<llo_original>
// kernel: dqn_forward.1
$region0: #{dqn_forward.1}
  #allocation0 [shape = 'u32[]', space=smem, size = 0x4, offset = 0x4, fixed_abs, tag = 'smem constant byte address 0x4 - core index']
  #allocation1 [shape = 'u32[144,128]{1,0:T(1,128)}', space=vmem, size = 0x12000, scoped, tag = 'internal scratch']
  %s0 = inlined_call_operand.vmem [shape: f32[512,16], index: 0, kind: input, shape index: {}]
  %s1 = inlined_call_operand.vmem [shape: f32[16,128], index: 1, kind: input, shape index: {}]
  %s2 = inlined_call_operand.vmem [shape: f32[1,128], index: 2, kind: input, shape index: {}]
  %s3 = inlined_call_operand.vmem [shape: f32[128,128], index: 3, kind: input, shape index: {}]
  %s4 = inlined_call_operand.vmem [shape: f32[1,128], index: 4, kind: input, shape index: {}]
  %s5 = inlined_call_operand.vmem [shape: f32[128,4], index: 5, kind: input, shape index: {}]
  %s6 = inlined_call_operand.vmem [shape: f32[1,4], index: 6, kind: input, shape index: {}]
  %s7 = inlined_call_operand.vmem [shape: f32[512,4], index: 7, kind: output, shape index: {}]
  %s8 = sld [smem:[#allocation0]]
  $region38: #{dqn_forward.1} parent=0
    _
  %s10 = ssub.s32 1, %s8
  %s11 = scalar_select 0, %s10, %s8
  // Predicated region
  $region2: #{dqn_forward.1} parent=0 // pred_check
    _
  $region3: #{dqn_forward.1} parent=0 // pred_check_branch
    %13 = sbr.rel (0) target = $region5
  $region4: #{dqn_forward.1} parent=0 // pred_region
    _
  $region5: #{dqn_forward.1} parent=0 // pred_fallthru
    _
  // Predicated region
  $region6: #{dqn_forward.1} parent=0 // pred_check
    _
  $region7: #{dqn_forward.1} parent=0 // pred_check_branch
    %15 = sbr.rel (0) target = $region9
  $region8: #{dqn_forward.1} parent=0 // pred_region
    _
  $region9: #{dqn_forward.1} parent=0 // pred_fallthru
    _
  // Predicated region
  $region10: #{dqn_forward.1} parent=0 // pred_check
    _
  $region11: #{dqn_forward.1} parent=0 // pred_check_branch
    %17 = sbr.rel (0) target = $region13
  $region12: #{dqn_forward.1} parent=0 // pred_region
    _
  $region13: #{dqn_forward.1} parent=0 // pred_fallthru
    _
  // Predicated region
  $region14: #{dqn_forward.1} parent=0 // pred_check
    _
  $region15: #{dqn_forward.1} parent=0 // pred_check_branch
    %19 = sbr.rel (0) target = $region17
  $region16: #{dqn_forward.1} parent=0 // pred_region
    _
  $region17: #{dqn_forward.1} parent=0 // pred_fallthru
    _
  // Predicated region
  $region18: #{dqn_forward.1} parent=0 // pred_check
    _
  $region19: #{dqn_forward.1} parent=0 // pred_check_branch
    %21 = sbr.rel (0) target = $region21
  $region20: #{dqn_forward.1} parent=0 // pred_region
    _
  $region21: #{dqn_forward.1} parent=0 // pred_fallthru
    _
  // Predicated region
  $region22: #{dqn_forward.1} parent=0 // pred_check
    _
  $region23: #{dqn_forward.1} parent=0 // pred_check_branch
    %23 = sbr.rel (0) target = $region25
  $region24: #{dqn_forward.1} parent=0 // pred_region
    _
  $region25: #{dqn_forward.1} parent=0 // pred_fallthru
    _
  // Predicated region
  $region26: #{dqn_forward.1} parent=0 // pred_check
    _
  $region27: #{dqn_forward.1} parent=0 // pred_check_branch
    %25 = sbr.rel (0) target = $region29
  $region28: #{dqn_forward.1} parent=0 // pred_region
    _
  $region29: #{dqn_forward.1} parent=0 // pred_fallthru
    _
  %v26 = vld [vmem:[%s0] sm:$0xff]
  %v27 = vld [vmem:[%s0 + $0x8] sm:$0xff]
  %v28 = vld [vmem:[%s0 + $0x10] sm:$0xff]
  %v29 = vld [vmem:[%s0 + $0x18] sm:$0xff]
  %v30 = vld [vmem:[%s0 + $0x20] sm:$0xff]
  %v31 = vld [vmem:[%s0 + $0x28] sm:$0xff]
  %v32 = vld [vmem:[%s0 + $0x30] sm:$0xff]
  %v33 = vld [vmem:[%s0 + $0x38] sm:$0xff]
  %v34 = vld [vmem:[%s0 + $0x40] sm:$0xff]
  %v35 = vld [vmem:[%s0 + $0x48] sm:$0xff]
  %v36 = vld [vmem:[%s0 + $0x50] sm:$0xff]
  %v37 = vld [vmem:[%s0 + $0x58] sm:$0xff]
  %v38 = vld [vmem:[%s0 + $0x60] sm:$0xff]
  %v39 = vld [vmem:[%s0 + $0x68] sm:$0xff]
  %v40 = vld [vmem:[%s0 + $0x70] sm:$0xff]
  %v41 = vld [vmem:[%s0 + $0x78] sm:$0xff]
  %v42 = vld [vmem:[%s0 + $0x80] sm:$0xff]
  %v43 = vld [vmem:[%s0 + $0x88] sm:$0xff]
  %v44 = vld [vmem:[%s0 + $0x90] sm:$0xff]
  %v45 = vld [vmem:[%s0 + $0x98] sm:$0xff]
  %v46 = vld [vmem:[%s0 + $0xa0] sm:$0xff]
  %v47 = vld [vmem:[%s0 + $0xa8] sm:$0xff]
  %v48 = vld [vmem:[%s0 + $0xb0] sm:$0xff]
  %v49 = vld [vmem:[%s0 + $0xb8] sm:$0xff]
  %v50 = vld [vmem:[%s0 + $0xc0] sm:$0xff]
  %v51 = vld [vmem:[%s0 + $0xc8] sm:$0xff]
  %v52 = vld [vmem:[%s0 + $0xd0] sm:$0xff]
  %v53 = vld [vmem:[%s0 + $0xd8] sm:$0xff]
  %v54 = vld [vmem:[%s0 + $0xe0] sm:$0xff]
  %v55 = vld [vmem:[%s0 + $0xe8] sm:$0xff]
  %v56 = vld [vmem:[%s0 + $0xf0] sm:$0xff]
  %v57 = vld [vmem:[%s0 + $0xf8] sm:$0xff]
  %v58 = vld [vmem:[%s0 + $0x100] sm:$0xff]
  %v59 = vld [vmem:[%s0 + $0x108] sm:$0xff]
  %v60 = vld [vmem:[%s0 + $0x110] sm:$0xff]
  %v61 = vld [vmem:[%s0 + $0x118] sm:$0xff]
  %v62 = vld [vmem:[%s0 + $0x120] sm:$0xff]
  %v63 = vld [vmem:[%s0 + $0x128] sm:$0xff]
  %v64 = vld [vmem:[%s0 + $0x130] sm:$0xff]
  %v65 = vld [vmem:[%s0 + $0x138] sm:$0xff]
  %v66 = vld [vmem:[%s0 + $0x140] sm:$0xff]
  %v67 = vld [vmem:[%s0 + $0x148] sm:$0xff]
  %v68 = vld [vmem:[%s0 + $0x150] sm:$0xff]
  %v69 = vld [vmem:[%s0 + $0x158] sm:$0xff]
  %v70 = vld [vmem:[%s0 + $0x160] sm:$0xff]
  %v71 = vld [vmem:[%s0 + $0x168] sm:$0xff]
  %v72 = vld [vmem:[%s0 + $0x170] sm:$0xff]
  %v73 = vld [vmem:[%s0 + $0x178] sm:$0xff]
  %v74 = vld [vmem:[%s0 + $0x180] sm:$0xff]
  %v75 = vld [vmem:[%s0 + $0x188] sm:$0xff]
  %v76 = vld [vmem:[%s0 + $0x190] sm:$0xff]
  %v77 = vld [vmem:[%s0 + $0x198] sm:$0xff]
  %v78 = vld [vmem:[%s0 + $0x1a0] sm:$0xff]
  %v79 = vld [vmem:[%s0 + $0x1a8] sm:$0xff]
  %v80 = vld [vmem:[%s0 + $0x1b0] sm:$0xff]
  %v81 = vld [vmem:[%s0 + $0x1b8] sm:$0xff]
  %v82 = vld [vmem:[%s0 + $0x1c0] sm:$0xff]
  %v83 = vld [vmem:[%s0 + $0x1c8] sm:$0xff]
  %v84 = vld [vmem:[%s0 + $0x1d0] sm:$0xff]
  %v85 = vld [vmem:[%s0 + $0x1d8] sm:$0xff]
  %v86 = vld [vmem:[%s0 + $0x1e0] sm:$0xff]
  %v87 = vld [vmem:[%s0 + $0x1e8] sm:$0xff]
  %v88 = vld [vmem:[%s0 + $0x1f0] sm:$0xff]
  %v89 = vld [vmem:[%s0 + $0x1f8] sm:$0xff]
  %v90 = vld [vmem:[%s1] sm:$0xff]
  %v91 = vld [vmem:[%s1 + $0x8] sm:$0xff]
  %v92 = vld [vmem:[%s2] sm:$0x1]
  %v94 = vlaneseq
  %v95 = vshrl.u32 %v94, 7
  %v96 = vsub.s32 0, %v95
  %v97 = vrot.slane %v92, %v96
  %vm99 = vcmask 130048
  %v101 = vsel %vm99, %v26, 0
  %v104 = vsel %vm99, %v27, 0
  %v107 = vsel %vm99, %v28, 0
  %v110 = vsel %vm99, %v29, 0
  %v113 = vsel %vm99, %v30, 0
  %v116 = vsel %vm99, %v31, 0
  %v119 = vsel %vm99, %v32, 0
  %v122 = vsel %vm99, %v33, 0
  %v125 = vsel %vm99, %v34, 0
  %v128 = vsel %vm99, %v35, 0
  %v131 = vsel %vm99, %v36, 0
  %v134 = vsel %vm99, %v37, 0
  %v137 = vsel %vm99, %v38, 0
  %v140 = vsel %vm99, %v39, 0
  %v143 = vsel %vm99, %v40, 0
  %v146 = vsel %vm99, %v41, 0
  %v149 = vsel %vm99, %v42, 0
  %v152 = vsel %vm99, %v43, 0
  %v155 = vsel %vm99, %v44, 0
  %v158 = vsel %vm99, %v45, 0
  %v161 = vsel %vm99, %v46, 0
  %v164 = vsel %vm99, %v47, 0
  %v167 = vsel %vm99, %v48, 0
  %v170 = vsel %vm99, %v49, 0
  %v173 = vsel %vm99, %v50, 0
  %v176 = vsel %vm99, %v51, 0
  %v179 = vsel %vm99, %v52, 0
  %v182 = vsel %vm99, %v53, 0
  %v185 = vsel %vm99, %v54, 0
  %v188 = vsel %vm99, %v55, 0
  %v191 = vsel %vm99, %v56, 0
  %v194 = vsel %vm99, %v57, 0
  %v197 = vsel %vm99, %v58, 0
  %v200 = vsel %vm99, %v59, 0
  %v203 = vsel %vm99, %v60, 0
  %v206 = vsel %vm99, %v61, 0
  %v209 = vsel %vm99, %v62, 0
  %v212 = vsel %vm99, %v63, 0
  %v215 = vsel %vm99, %v64, 0
  %v218 = vsel %vm99, %v65, 0
  %v221 = vsel %vm99, %v66, 0
  %v224 = vsel %vm99, %v67, 0
  %v227 = vsel %vm99, %v68, 0
  %v230 = vsel %vm99, %v69, 0
  %v233 = vsel %vm99, %v70, 0
  %v236 = vsel %vm99, %v71, 0
  %v239 = vsel %vm99, %v72, 0
  %v242 = vsel %vm99, %v73, 0
  %v245 = vsel %vm99, %v74, 0
  %v248 = vsel %vm99, %v75, 0
  %v251 = vsel %vm99, %v76, 0
  %v254 = vsel %vm99, %v77, 0
  %v257 = vsel %vm99, %v78, 0
  %v260 = vsel %vm99, %v79, 0
  %v263 = vsel %vm99, %v80, 0
  %v266 = vsel %vm99, %v81, 0
  %v269 = vsel %vm99, %v82, 0
  %v272 = vsel %vm99, %v83, 0
  %v275 = vsel %vm99, %v84, 0
  %v278 = vsel %vm99, %v85, 0
  %v281 = vsel %vm99, %v86, 0
  %v284 = vsel %vm99, %v87, 0
  %v287 = vsel %vm99, %v88, 0
  %v290 = vsel %vm99, %v89, 0
  %292 = vmatprep.subr.mxu0 0.0
  %293 = vmatpush1.msra.mxu0 0.0
  %294 = vmatprep.subr.mxu0 0.0
  %295 = vmatpush1.msra.mxu0 0.0
  %296 = vmatprep.subr.mxu0 0.0
  %297 = vmatpush1.msra.mxu0 0.0
  %298 = vmatprep.subr.mxu0 0.0
  %299 = vmatpush1.msra.mxu0 0.0
  %300 = vmatprep.subr.mxu0 0.0
  %301 = vmatpush1.msra.mxu0 0.0
  %302 = vmatprep.subr.mxu0 0.0
  %303 = vmatpush1.msra.mxu0 0.0
  %304 = vmatprep.subr.mxu0 0.0
  %305 = vmatpush1.msra.mxu0 0.0
  %306 = vmatprep.subr.mxu0 0.0
  %307 = vmatpush1.msra.mxu0 0.0
  %308 = vmatprep.subr.mxu0 0.0
  %309 = vmatpush1.msra.mxu0 0.0
  %310 = vmatprep.subr.mxu0 0.0
  %311 = vmatpush1.msra.mxu0 0.0
  %312 = vmatprep.subr.mxu0 0.0
  %313 = vmatpush1.msra.mxu0 0.0
  %314 = vmatprep.subr.mxu0 0.0
  %315 = vmatpush1.msra.mxu0 0.0
  %316 = vmatprep.subr.mxu0 0.0
  %317 = vmatpush1.msra.mxu0 0.0
  %318 = vmatprep.subr.mxu0 0.0
  %319 = vmatpush1.msra.mxu0 0.0
  %320 = vmatprep.subr.mxu0 0.0
  %321 = vmatpush1.msra.mxu0 %v91
  %322 = vmatprep.subr.mxu0 0.0
  %323 = vmatpush1.msra.mxu0 %v90
  %324 = vmatprep.subr.mxu0 0.0
  %325 = vmatpush2.msra.mxu0 0.0
  %326 = vmatprep.subr.mxu0 0.0
  %327 = vmatpush2.msra.mxu0 0.0
  %328 = vmatprep.subr.mxu0 0.0
  %329 = vmatpush2.msra.mxu0 0.0
  %330 = vmatprep.subr.mxu0 0.0
  %331 = vmatpush2.msra.mxu0 0.0
  %332 = vmatprep.subr.mxu0 0.0
  %333 = vmatpush2.msra.mxu0 0.0
  %334 = vmatprep.subr.mxu0 0.0
  %335 = vmatpush2.msra.mxu0 0.0
  %336 = vmatprep.subr.mxu0 0.0
  %337 = vmatpush2.msra.mxu0 0.0
  %338 = vmatprep.subr.mxu0 0.0
  %339 = vmatpush2.msra.mxu0 0.0
  %340 = vmatprep.subr.mxu0 0.0
  %341 = vmatpush2.msra.mxu0 0.0
  %342 = vmatprep.subr.mxu0 0.0
  %343 = vmatpush2.msra.mxu0 0.0
  %344 = vmatprep.subr.mxu0 0.0
  %345 = vmatpush2.msra.mxu0 0.0
  %346 = vmatprep.subr.mxu0 0.0
  %347 = vmatpush2.msra.mxu0 0.0
  %348 = vmatprep.subr.mxu0 0.0
  %349 = vmatpush2.msra.mxu0 0.0
  %350 = vmatprep.subr.mxu0 0.0
  %351 = vmatpush2.msra.mxu0 0.0
  %352 = vmatprep.subr.mxu0 0.0
  %353 = vmatpush2.msra.mxu0 0.0
  %354 = vmatprep.subr.mxu0 0.0
  %355 = vmatpush2.msra.mxu0 0.0
  %356 = vmatprep.mubr.f32.mxu0 0.0
  %357 = vmatmul.mubr.f32.gmra.mxu0 %v101
  %v358 = vpop.f32.mrf.mxu0
  %v359 = vadd.f32 %v97, %v358
  %v360 = vpop.f32.mrf.mxu0
  %361 = vmatprep.mubr.f32.mxu0 0.0
  %362 = vmatmul.mubr.f32.gmra.mxu0 %v104
  %v363 = vpop.f32.mrf.mxu0
  %v364 = vadd.f32 %v97, %v363
  %v365 = vpop.f32.mrf.mxu0
  %366 = vmatprep.mubr.f32.mxu0 0.0
  %367 = vmatmul.mubr.f32.gmra.mxu0 %v107
  %v368 = vpop.f32.mrf.mxu0
  %v369 = vadd.f32 %v97, %v368
  %v370 = vpop.f32.mrf.mxu0
  %371 = vmatprep.mubr.f32.mxu0 0.0
  %372 = vmatmul.mubr.f32.gmra.mxu0 %v110
  %v373 = vpop.f32.mrf.mxu0
  %v374 = vadd.f32 %v97, %v373
  %v375 = vpop.f32.mrf.mxu0
  %376 = vmatprep.mubr.f32.mxu0 0.0
  %377 = vmatmul.mubr.f32.gmra.mxu0 %v113
  %v378 = vpop.f32.mrf.mxu0
  %v379 = vadd.f32 %v97, %v378
  %v380 = vpop.f32.mrf.mxu0
  %381 = vmatprep.mubr.f32.mxu0 0.0
  %382 = vmatmul.mubr.f32.gmra.mxu0 %v116
  %v383 = vpop.f32.mrf.mxu0
  %v384 = vadd.f32 %v97, %v383
  %v385 = vpop.f32.mrf.mxu0
  %386 = vmatprep.mubr.f32.mxu0 0.0
  %387 = vmatmul.mubr.f32.gmra.mxu0 %v119
  %v388 = vpop.f32.mrf.mxu0
  %v389 = vadd.f32 %v97, %v388
  %v390 = vpop.f32.mrf.mxu0
  %391 = vmatprep.mubr.f32.mxu0 0.0
  %392 = vmatmul.mubr.f32.gmra.mxu0 %v122
  %v393 = vpop.f32.mrf.mxu0
  %v394 = vadd.f32 %v97, %v393
  %v395 = vpop.f32.mrf.mxu0
  %396 = vmatprep.mubr.f32.mxu0 0.0
  %397 = vmatmul.mubr.f32.gmra.mxu0 %v125
  %v398 = vpop.f32.mrf.mxu0
  %v399 = vadd.f32 %v97, %v398
  %v400 = vpop.f32.mrf.mxu0
  %401 = vmatprep.mubr.f32.mxu0 0.0
  %402 = vmatmul.mubr.f32.gmra.mxu0 %v128
  %v403 = vpop.f32.mrf.mxu0
  %v404 = vadd.f32 %v97, %v403
  %v405 = vpop.f32.mrf.mxu0
  %406 = vmatprep.mubr.f32.mxu0 0.0
  %407 = vmatmul.mubr.f32.gmra.mxu0 %v131
  %v408 = vpop.f32.mrf.mxu0
  %v409 = vadd.f32 %v97, %v408
  %v410 = vpop.f32.mrf.mxu0
  %411 = vmatprep.mubr.f32.mxu0 0.0
  %412 = vmatmul.mubr.f32.gmra.mxu0 %v134
  %v413 = vpop.f32.mrf.mxu0
  %v414 = vadd.f32 %v97, %v413
  %v415 = vpop.f32.mrf.mxu0
  %416 = vmatprep.mubr.f32.mxu0 0.0
  %417 = vmatmul.mubr.f32.gmra.mxu0 %v137
  %v418 = vpop.f32.mrf.mxu0
  %v419 = vadd.f32 %v97, %v418
  %v420 = vpop.f32.mrf.mxu0
  %421 = vmatprep.mubr.f32.mxu0 0.0
  %422 = vmatmul.mubr.f32.gmra.mxu0 %v140
  %v423 = vpop.f32.mrf.mxu0
  %v424 = vadd.f32 %v97, %v423
  %v425 = vpop.f32.mrf.mxu0
  %426 = vmatprep.mubr.f32.mxu0 0.0
  %427 = vmatmul.mubr.f32.gmra.mxu0 %v143
  %v428 = vpop.f32.mrf.mxu0
  %v429 = vadd.f32 %v97, %v428
  %v430 = vpop.f32.mrf.mxu0
  %431 = vmatprep.mubr.f32.mxu0 0.0
  %432 = vmatmul.mubr.f32.gmra.mxu0 %v146
  %v433 = vpop.f32.mrf.mxu0
  %v434 = vadd.f32 %v97, %v433
  %v435 = vpop.f32.mrf.mxu0
  %436 = vmatprep.mubr.f32.mxu0 0.0
  %437 = vmatmul.mubr.f32.gmra.mxu0 %v149
  %v438 = vpop.f32.mrf.mxu0
  %v439 = vadd.f32 %v97, %v438
  %v440 = vpop.f32.mrf.mxu0
  %441 = vmatprep.mubr.f32.mxu0 0.0
  %442 = vmatmul.mubr.f32.gmra.mxu0 %v152
  %v443 = vpop.f32.mrf.mxu0
  %v444 = vadd.f32 %v97, %v443
  %v445 = vpop.f32.mrf.mxu0
  %446 = vmatprep.mubr.f32.mxu0 0.0
  %447 = vmatmul.mubr.f32.gmra.mxu0 %v155
  %v448 = vpop.f32.mrf.mxu0
  %v449 = vadd.f32 %v97, %v448
  %v450 = vpop.f32.mrf.mxu0
  %451 = vmatprep.mubr.f32.mxu0 0.0
  %452 = vmatmul.mubr.f32.gmra.mxu0 %v158
  %v453 = vpop.f32.mrf.mxu0
  %v454 = vadd.f32 %v97, %v453
  %v455 = vpop.f32.mrf.mxu0
  %456 = vmatprep.mubr.f32.mxu0 0.0
  %457 = vmatmul.mubr.f32.gmra.mxu0 %v161
  %v458 = vpop.f32.mrf.mxu0
  %v459 = vadd.f32 %v97, %v458
  %v460 = vpop.f32.mrf.mxu0
  %461 = vmatprep.mubr.f32.mxu0 0.0
  %462 = vmatmul.mubr.f32.gmra.mxu0 %v164
  %v463 = vpop.f32.mrf.mxu0
  %v464 = vadd.f32 %v97, %v463
  %v465 = vpop.f32.mrf.mxu0
  %466 = vmatprep.mubr.f32.mxu0 0.0
  %467 = vmatmul.mubr.f32.gmra.mxu0 %v167
  %v468 = vpop.f32.mrf.mxu0
  %v469 = vadd.f32 %v97, %v468
  %v470 = vpop.f32.mrf.mxu0
  %471 = vmatprep.mubr.f32.mxu0 0.0
  %472 = vmatmul.mubr.f32.gmra.mxu0 %v170
  %v473 = vpop.f32.mrf.mxu0
  %v474 = vadd.f32 %v97, %v473
  %v475 = vpop.f32.mrf.mxu0
  %476 = vmatprep.mubr.f32.mxu0 0.0
  %477 = vmatmul.mubr.f32.gmra.mxu0 %v173
  %v478 = vpop.f32.mrf.mxu0
  %v479 = vadd.f32 %v97, %v478
  %v480 = vpop.f32.mrf.mxu0
  %481 = vmatprep.mubr.f32.mxu0 0.0
  %482 = vmatmul.mubr.f32.gmra.mxu0 %v176
  %v483 = vpop.f32.mrf.mxu0
  %v484 = vadd.f32 %v97, %v483
  %v485 = vpop.f32.mrf.mxu0
  %486 = vmatprep.mubr.f32.mxu0 0.0
  %487 = vmatmul.mubr.f32.gmra.mxu0 %v179
  %v488 = vpop.f32.mrf.mxu0
  %v489 = vadd.f32 %v97, %v488
  %v490 = vpop.f32.mrf.mxu0
  %491 = vmatprep.mubr.f32.mxu0 0.0
  %492 = vmatmul.mubr.f32.gmra.mxu0 %v182
  %v493 = vpop.f32.mrf.mxu0
  %v494 = vadd.f32 %v97, %v493
  %v495 = vpop.f32.mrf.mxu0
  %496 = vmatprep.mubr.f32.mxu0 0.0
  %497 = vmatmul.mubr.f32.gmra.mxu0 %v185
  %v498 = vpop.f32.mrf.mxu0
  %v499 = vadd.f32 %v97, %v498
  %v500 = vpop.f32.mrf.mxu0
  %501 = vmatprep.mubr.f32.mxu0 0.0
  %502 = vmatmul.mubr.f32.gmra.mxu0 %v188
  %v503 = vpop.f32.mrf.mxu0
  %v504 = vadd.f32 %v97, %v503
  %v505 = vpop.f32.mrf.mxu0
  %506 = vmatprep.mubr.f32.mxu0 0.0
  %507 = vmatmul.mubr.f32.gmra.mxu0 %v191
  %v508 = vpop.f32.mrf.mxu0
  %v509 = vadd.f32 %v97, %v508
  %v510 = vpop.f32.mrf.mxu0
  %511 = vmatprep.mubr.f32.mxu0 0.0
  %512 = vmatmul.mubr.f32.gmra.mxu0 %v194
  %v513 = vpop.f32.mrf.mxu0
  %v514 = vadd.f32 %v97, %v513
  %v515 = vpop.f32.mrf.mxu0
  %516 = vmatprep.mubr.f32.mxu0 0.0
  %517 = vmatmul.mubr.f32.gmra.mxu0 %v197
  %v518 = vpop.f32.mrf.mxu0
  %v519 = vadd.f32 %v97, %v518
  %v520 = vpop.f32.mrf.mxu0
  %521 = vmatprep.mubr.f32.mxu0 0.0
  %522 = vmatmul.mubr.f32.gmra.mxu0 %v200
  %v523 = vpop.f32.mrf.mxu0
  %v524 = vadd.f32 %v97, %v523
  %v525 = vpop.f32.mrf.mxu0
  %526 = vmatprep.mubr.f32.mxu0 0.0
  %527 = vmatmul.mubr.f32.gmra.mxu0 %v203
  %v528 = vpop.f32.mrf.mxu0
  %v529 = vadd.f32 %v97, %v528
  %v530 = vpop.f32.mrf.mxu0
  %531 = vmatprep.mubr.f32.mxu0 0.0
  %532 = vmatmul.mubr.f32.gmra.mxu0 %v206
  %v533 = vpop.f32.mrf.mxu0
  %v534 = vadd.f32 %v97, %v533
  %v535 = vpop.f32.mrf.mxu0
  %536 = vmatprep.mubr.f32.mxu0 0.0
  %537 = vmatmul.mubr.f32.gmra.mxu0 %v209
  %v538 = vpop.f32.mrf.mxu0
  %v539 = vadd.f32 %v97, %v538
  %v540 = vpop.f32.mrf.mxu0
  %541 = vmatprep.mubr.f32.mxu0 0.0
  %542 = vmatmul.mubr.f32.gmra.mxu0 %v212
  %v543 = vpop.f32.mrf.mxu0
  %v544 = vadd.f32 %v97, %v543
  %v545 = vpop.f32.mrf.mxu0
  %546 = vmatprep.mubr.f32.mxu0 0.0
  %547 = vmatmul.mubr.f32.gmra.mxu0 %v215
  %v548 = vpop.f32.mrf.mxu0
  %v549 = vadd.f32 %v97, %v548
  %v550 = vpop.f32.mrf.mxu0
  %551 = vmatprep.mubr.f32.mxu0 0.0
  %552 = vmatmul.mubr.f32.gmra.mxu0 %v218
  %v553 = vpop.f32.mrf.mxu0
  %v554 = vadd.f32 %v97, %v553
  %v555 = vpop.f32.mrf.mxu0
  %556 = vmatprep.mubr.f32.mxu0 0.0
  %557 = vmatmul.mubr.f32.gmra.mxu0 %v221
  %v558 = vpop.f32.mrf.mxu0
  %v559 = vadd.f32 %v97, %v558
  %v560 = vpop.f32.mrf.mxu0
  %561 = vmatprep.mubr.f32.mxu0 0.0
  %562 = vmatmul.mubr.f32.gmra.mxu0 %v224
  %v563 = vpop.f32.mrf.mxu0
  %v564 = vadd.f32 %v97, %v563
  %v565 = vpop.f32.mrf.mxu0
  %566 = vmatprep.mubr.f32.mxu0 0.0
  %567 = vmatmul.mubr.f32.gmra.mxu0 %v227
  %v568 = vpop.f32.mrf.mxu0
  %v569 = vadd.f32 %v97, %v568
  %v570 = vpop.f32.mrf.mxu0
  %571 = vmatprep.mubr.f32.mxu0 0.0
  %572 = vmatmul.mubr.f32.gmra.mxu0 %v230
  %v573 = vpop.f32.mrf.mxu0
  %v574 = vadd.f32 %v97, %v573
  %v575 = vpop.f32.mrf.mxu0
  %576 = vmatprep.mubr.f32.mxu0 0.0
  %577 = vmatmul.mubr.f32.gmra.mxu0 %v233
  %v578 = vpop.f32.mrf.mxu0
  %v579 = vadd.f32 %v97, %v578
  %v580 = vpop.f32.mrf.mxu0
  %581 = vmatprep.mubr.f32.mxu0 0.0
  %582 = vmatmul.mubr.f32.gmra.mxu0 %v236
  %v583 = vpop.f32.mrf.mxu0
  %v584 = vadd.f32 %v97, %v583
  %v585 = vpop.f32.mrf.mxu0
  %586 = vmatprep.mubr.f32.mxu0 0.0
  %587 = vmatmul.mubr.f32.gmra.mxu0 %v239
  %v588 = vpop.f32.mrf.mxu0
  %v589 = vadd.f32 %v97, %v588
  %v590 = vpop.f32.mrf.mxu0
  %591 = vmatprep.mubr.f32.mxu0 0.0
  %592 = vmatmul.mubr.f32.gmra.mxu0 %v242
  %v593 = vpop.f32.mrf.mxu0
  %v594 = vadd.f32 %v97, %v593
  %v595 = vpop.f32.mrf.mxu0
  %596 = vmatprep.mubr.f32.mxu0 0.0
  %597 = vmatmul.mubr.f32.gmra.mxu0 %v245
  %v598 = vpop.f32.mrf.mxu0
  %v599 = vadd.f32 %v97, %v598
  %v600 = vpop.f32.mrf.mxu0
  %601 = vmatprep.mubr.f32.mxu0 0.0
  %602 = vmatmul.mubr.f32.gmra.mxu0 %v248
  %v603 = vpop.f32.mrf.mxu0
  %v604 = vadd.f32 %v97, %v603
  %v605 = vpop.f32.mrf.mxu0
  %606 = vmatprep.mubr.f32.mxu0 0.0
  %607 = vmatmul.mubr.f32.gmra.mxu0 %v251
  %v608 = vpop.f32.mrf.mxu0
  %v609 = vadd.f32 %v97, %v608
  %v610 = vpop.f32.mrf.mxu0
  %611 = vmatprep.mubr.f32.mxu0 0.0
  %612 = vmatmul.mubr.f32.gmra.mxu0 %v254
  %v613 = vpop.f32.mrf.mxu0
  %v614 = vadd.f32 %v97, %v613
  %v615 = vpop.f32.mrf.mxu0
  %616 = vmatprep.mubr.f32.mxu0 0.0
  %617 = vmatmul.mubr.f32.gmra.mxu0 %v257
  %v618 = vpop.f32.mrf.mxu0
  %v619 = vadd.f32 %v97, %v618
  %v620 = vpop.f32.mrf.mxu0
  %621 = vmatprep.mubr.f32.mxu0 0.0
  %622 = vmatmul.mubr.f32.gmra.mxu0 %v260
  %v623 = vpop.f32.mrf.mxu0
  %v624 = vadd.f32 %v97, %v623
  %v625 = vpop.f32.mrf.mxu0
  %626 = vmatprep.mubr.f32.mxu0 0.0
  %627 = vmatmul.mubr.f32.gmra.mxu0 %v263
  %v628 = vpop.f32.mrf.mxu0
  %v629 = vadd.f32 %v97, %v628
  %v630 = vpop.f32.mrf.mxu0
  %631 = vmatprep.mubr.f32.mxu0 0.0
  %632 = vmatmul.mubr.f32.gmra.mxu0 %v266
  %v633 = vpop.f32.mrf.mxu0
  %v634 = vadd.f32 %v97, %v633
  %v635 = vpop.f32.mrf.mxu0
  %636 = vmatprep.mubr.f32.mxu0 0.0
  %637 = vmatmul.mubr.f32.gmra.mxu0 %v269
  %v638 = vpop.f32.mrf.mxu0
  %v639 = vadd.f32 %v97, %v638
  %v640 = vpop.f32.mrf.mxu0
  %641 = vmatprep.mubr.f32.mxu0 0.0
  %642 = vmatmul.mubr.f32.gmra.mxu0 %v272
  %v643 = vpop.f32.mrf.mxu0
  %v644 = vadd.f32 %v97, %v643
  %v645 = vpop.f32.mrf.mxu0
  %646 = vmatprep.mubr.f32.mxu0 0.0
  %647 = vmatmul.mubr.f32.gmra.mxu0 %v275
  %v648 = vpop.f32.mrf.mxu0
  %v649 = vadd.f32 %v97, %v648
  %v650 = vpop.f32.mrf.mxu0
  %651 = vmatprep.mubr.f32.mxu0 0.0
  %652 = vmatmul.mubr.f32.gmra.mxu0 %v278
  %v653 = vpop.f32.mrf.mxu0
  %v654 = vadd.f32 %v97, %v653
  %v655 = vpop.f32.mrf.mxu0
  %656 = vmatprep.mubr.f32.mxu0 0.0
  %657 = vmatmul.mubr.f32.gmra.mxu0 %v281
  %v658 = vpop.f32.mrf.mxu0
  %v659 = vadd.f32 %v97, %v658
  %v660 = vpop.f32.mrf.mxu0
  %661 = vmatprep.mubr.f32.mxu0 0.0
  %662 = vmatmul.mubr.f32.gmra.mxu0 %v284
  %v663 = vpop.f32.mrf.mxu0
  %v664 = vadd.f32 %v97, %v663
  %v665 = vpop.f32.mrf.mxu0
  %666 = vmatprep.mubr.f32.mxu0 0.0
  %667 = vmatmul.mubr.f32.gmra.mxu0 %v287
  %v668 = vpop.f32.mrf.mxu0
  %v669 = vadd.f32 %v97, %v668
  %v670 = vpop.f32.mrf.mxu0
  %671 = vmatprep.mubr.f32.mxu0 0.0
  %672 = vmatmul.mubr.f32.gmra.mxu0 %v290
  %v673 = vpop.f32.mrf.mxu0
  %v674 = vadd.f32 %v97, %v673
  %v675 = vpop.f32.mrf.mxu0
  %676 = vdwg.mxu0
  %v677 = vmax.f32 %v359, 0.0
  %v678 = vmax.f32 %v364, 0.0
  %v679 = vmax.f32 %v369, 0.0
  %v680 = vmax.f32 %v374, 0.0
  %v681 = vmax.f32 %v379, 0.0
  %v682 = vmax.f32 %v384, 0.0
  %v683 = vmax.f32 %v389, 0.0
  %v684 = vmax.f32 %v394, 0.0
  %v685 = vmax.f32 %v399, 0.0
  %v686 = vmax.f32 %v404, 0.0
  %v687 = vmax.f32 %v409, 0.0
  %v688 = vmax.f32 %v414, 0.0
  %v689 = vmax.f32 %v419, 0.0
  %v690 = vmax.f32 %v424, 0.0
  %v691 = vmax.f32 %v429, 0.0
  %v692 = vmax.f32 %v434, 0.0
  %v693 = vmax.f32 %v439, 0.0
  %v694 = vmax.f32 %v444, 0.0
  %v695 = vmax.f32 %v449, 0.0
  %v696 = vmax.f32 %v454, 0.0
  %v697 = vmax.f32 %v459, 0.0
  %v698 = vmax.f32 %v464, 0.0
  %v699 = vmax.f32 %v469, 0.0
  %v700 = vmax.f32 %v474, 0.0
  %v701 = vmax.f32 %v479, 0.0
  %v702 = vmax.f32 %v484, 0.0
  %v703 = vmax.f32 %v489, 0.0
  %v704 = vmax.f32 %v494, 0.0
  %v705 = vmax.f32 %v499, 0.0
  %v706 = vmax.f32 %v504, 0.0
  %v707 = vmax.f32 %v509, 0.0
  %v708 = vmax.f32 %v514, 0.0
  %v709 = vmax.f32 %v519, 0.0
  %v710 = vmax.f32 %v524, 0.0
  %v711 = vmax.f32 %v529, 0.0
  %v712 = vmax.f32 %v534, 0.0
  %v713 = vmax.f32 %v539, 0.0
  %v714 = vmax.f32 %v544, 0.0
  %v715 = vmax.f32 %v549, 0.0
  %v716 = vmax.f32 %v554, 0.0
  %v717 = vmax.f32 %v559, 0.0
  %v718 = vmax.f32 %v564, 0.0
  %v719 = vmax.f32 %v569, 0.0
  %v720 = vmax.f32 %v574, 0.0
  %v721 = vmax.f32 %v579, 0.0
  %v722 = vmax.f32 %v584, 0.0
  %v723 = vmax.f32 %v589, 0.0
  %v724 = vmax.f32 %v594, 0.0
  %v725 = vmax.f32 %v599, 0.0
  %v726 = vmax.f32 %v604, 0.0
  %v727 = vmax.f32 %v609, 0.0
  %v728 = vmax.f32 %v614, 0.0
  %v729 = vmax.f32 %v619, 0.0
  %v730 = vmax.f32 %v624, 0.0
  %v731 = vmax.f32 %v629, 0.0
  %v732 = vmax.f32 %v634, 0.0
  %v733 = vmax.f32 %v639, 0.0
  %v734 = vmax.f32 %v644, 0.0
  %v735 = vmax.f32 %v649, 0.0
  %v736 = vmax.f32 %v654, 0.0
  %v737 = vmax.f32 %v659, 0.0
  %v738 = vmax.f32 %v664, 0.0
  %v739 = vmax.f32 %v669, 0.0
  %v740 = vmax.f32 %v674, 0.0
  %v741 = vld [vmem:[%s3] sm:$0xff]
  %v742 = vld [vmem:[%s3 + $0x8] sm:$0xff]
  %v743 = vld [vmem:[%s3 + $0x10] sm:$0xff]
  %v744 = vld [vmem:[%s3 + $0x18] sm:$0xff]
  %v745 = vld [vmem:[%s3 + $0x20] sm:$0xff]
  %v746 = vld [vmem:[%s3 + $0x28] sm:$0xff]
  %v747 = vld [vmem:[%s3 + $0x30] sm:$0xff]
  %v748 = vld [vmem:[%s3 + $0x38] sm:$0xff]
  %v749 = vld [vmem:[%s3 + $0x40] sm:$0xff]
  %v750 = vld [vmem:[%s3 + $0x48] sm:$0xff]
  %v751 = vld [vmem:[%s3 + $0x50] sm:$0xff]
  %v752 = vld [vmem:[%s3 + $0x58] sm:$0xff]
  %v753 = vld [vmem:[%s3 + $0x60] sm:$0xff]
  %v754 = vld [vmem:[%s3 + $0x68] sm:$0xff]
  %v755 = vld [vmem:[%s3 + $0x70] sm:$0xff]
  %v756 = vld [vmem:[%s3 + $0x78] sm:$0xff]
  %v757 = vld [vmem:[%s4] sm:$0x1]
  %v759 = vlaneseq
  %v760 = vshrl.u32 %v759, 7
  %v761 = vsub.s32 0, %v760
  %v762 = vrot.slane %v757, %v761
  %764 = vmatprep.subr.mxu0 0.0
  %765 = vmatpush1.msra.mxu0 %v756
  %766 = vmatprep.subr.mxu0 0.0
  %767 = vmatpush1.msra.mxu0 %v755
  %768 = vmatprep.subr.mxu0 0.0
  %769 = vmatpush1.msra.mxu0 %v754
  %770 = vmatprep.subr.mxu0 0.0
  %771 = vmatpush1.msra.mxu0 %v753
  %772 = vmatprep.subr.mxu0 0.0
  %773 = vmatpush1.msra.mxu0 %v752
  %774 = vmatprep.subr.mxu0 0.0
  %775 = vmatpush1.msra.mxu0 %v751
  %776 = vmatprep.subr.mxu0 0.0
  %777 = vmatpush1.msra.mxu0 %v750
  %778 = vmatprep.subr.mxu0 0.0
  %779 = vmatpush1.msra.mxu0 %v749
  %780 = vmatprep.subr.mxu0 0.0
  %781 = vmatpush1.msra.mxu0 %v748
  %782 = vmatprep.subr.mxu0 0.0
  %783 = vmatpush1.msra.mxu0 %v747
  %784 = vmatprep.subr.mxu0 0.0
  %785 = vmatpush1.msra.mxu0 %v746
  %786 = vmatprep.subr.mxu0 0.0
  %787 = vmatpush1.msra.mxu0 %v745
  %788 = vmatprep.subr.mxu0 0.0
  %789 = vmatpush1.msra.mxu0 %v744
  %790 = vmatprep.subr.mxu0 0.0
  %791 = vmatpush1.msra.mxu0 %v743
  %792 = vmatprep.subr.mxu0 0.0
  %793 = vmatpush1.msra.mxu0 %v742
  %794 = vmatprep.subr.mxu0 0.0
  %795 = vmatpush1.msra.mxu0 %v741
  %796 = vmatprep.subr.mxu0 0.0
  %797 = vmatpush2.msra.mxu0 0.0
  %798 = vmatprep.subr.mxu0 0.0
  %799 = vmatpush2.msra.mxu0 0.0
  %800 = vmatprep.subr.mxu0 0.0
  %801 = vmatpush2.msra.mxu0 0.0
  %802 = vmatprep.subr.mxu0 0.0
  %803 = vmatpush2.msra.mxu0 0.0
  %804 = vmatprep.subr.mxu0 0.0
  %805 = vmatpush2.msra.mxu0 0.0
  %806 = vmatprep.subr.mxu0 0.0
  %807 = vmatpush2.msra.mxu0 0.0
  %808 = vmatprep.subr.mxu0 0.0
  %809 = vmatpush2.msra.mxu0 0.0
  %810 = vmatprep.subr.mxu0 0.0
  %811 = vmatpush2.msra.mxu0 0.0
  %812 = vmatprep.subr.mxu0 0.0
  %813 = vmatpush2.msra.mxu0 0.0
  %814 = vmatprep.subr.mxu0 0.0
  %815 = vmatpush2.msra.mxu0 0.0
  %816 = vmatprep.subr.mxu0 0.0
  %817 = vmatpush2.msra.mxu0 0.0
  %818 = vmatprep.subr.mxu0 0.0
  %819 = vmatpush2.msra.mxu0 0.0
  %820 = vmatprep.subr.mxu0 0.0
  %821 = vmatpush2.msra.mxu0 0.0
  %822 = vmatprep.subr.mxu0 0.0
  %823 = vmatpush2.msra.mxu0 0.0
  %824 = vmatprep.subr.mxu0 0.0
  %825 = vmatpush2.msra.mxu0 0.0
  %826 = vmatprep.subr.mxu0 0.0
  %827 = vmatpush2.msra.mxu0 0.0
  %828 = vmatprep.mubr.f32.mxu0 0.0
  %829 = vmatmul.mubr.f32.gmra.mxu0 %v677
  %v830 = vpop.f32.mrf.mxu0
  %v831 = vadd.f32 %v762, %v830
  %v832 = vpop.f32.mrf.mxu0
  %833 = vmatprep.mubr.f32.mxu0 0.0
  %834 = vmatmul.mubr.f32.gmra.mxu0 %v678
  %v835 = vpop.f32.mrf.mxu0
  %v836 = vadd.f32 %v762, %v835
  %v837 = vpop.f32.mrf.mxu0
  %838 = vmatprep.mubr.f32.mxu0 0.0
  %839 = vmatmul.mubr.f32.gmra.mxu0 %v679
  %v840 = vpop.f32.mrf.mxu0
  %v841 = vadd.f32 %v762, %v840
  %v842 = vpop.f32.mrf.mxu0
  %843 = vmatprep.mubr.f32.mxu0 0.0
  %844 = vmatmul.mubr.f32.gmra.mxu0 %v680
  %v845 = vpop.f32.mrf.mxu0
  %v846 = vadd.f32 %v762, %v845
  %v847 = vpop.f32.mrf.mxu0
  %848 = vmatprep.mubr.f32.mxu0 0.0
  %849 = vmatmul.mubr.f32.gmra.mxu0 %v681
  %v850 = vpop.f32.mrf.mxu0
  %v851 = vadd.f32 %v762, %v850
  %v852 = vpop.f32.mrf.mxu0
  %853 = vmatprep.mubr.f32.mxu0 0.0
  %854 = vmatmul.mubr.f32.gmra.mxu0 %v682
  %v855 = vpop.f32.mrf.mxu0
  %v856 = vadd.f32 %v762, %v855
  %v857 = vpop.f32.mrf.mxu0
  %858 = vmatprep.mubr.f32.mxu0 0.0
  %859 = vmatmul.mubr.f32.gmra.mxu0 %v683
  %v860 = vpop.f32.mrf.mxu0
  %v861 = vadd.f32 %v762, %v860
  %v862 = vpop.f32.mrf.mxu0
  %863 = vmatprep.mubr.f32.mxu0 0.0
  %864 = vmatmul.mubr.f32.gmra.mxu0 %v684
  %v865 = vpop.f32.mrf.mxu0
  %v866 = vadd.f32 %v762, %v865
  %v867 = vpop.f32.mrf.mxu0
  %868 = vmatprep.mubr.f32.mxu0 0.0
  %869 = vmatmul.mubr.f32.gmra.mxu0 %v685
  %v870 = vpop.f32.mrf.mxu0
  %v871 = vadd.f32 %v762, %v870
  %v872 = vpop.f32.mrf.mxu0
  %873 = vmatprep.mubr.f32.mxu0 0.0
  %874 = vmatmul.mubr.f32.gmra.mxu0 %v686
  %v875 = vpop.f32.mrf.mxu0
  %v876 = vadd.f32 %v762, %v875
  %v877 = vpop.f32.mrf.mxu0
  %878 = vmatprep.mubr.f32.mxu0 0.0
  %879 = vmatmul.mubr.f32.gmra.mxu0 %v687
  %v880 = vpop.f32.mrf.mxu0
  %v881 = vadd.f32 %v762, %v880
  %v882 = vpop.f32.mrf.mxu0
  %883 = vmatprep.mubr.f32.mxu0 0.0
  %884 = vmatmul.mubr.f32.gmra.mxu0 %v688
  %v885 = vpop.f32.mrf.mxu0
  %v886 = vadd.f32 %v762, %v885
  %v887 = vpop.f32.mrf.mxu0
  %888 = vmatprep.mubr.f32.mxu0 0.0
  %889 = vmatmul.mubr.f32.gmra.mxu0 %v689
  %v890 = vpop.f32.mrf.mxu0
  %v891 = vadd.f32 %v762, %v890
  %v892 = vpop.f32.mrf.mxu0
  %893 = vmatprep.mubr.f32.mxu0 0.0
  %894 = vmatmul.mubr.f32.gmra.mxu0 %v690
  %v895 = vpop.f32.mrf.mxu0
  %v896 = vadd.f32 %v762, %v895
  %v897 = vpop.f32.mrf.mxu0
  %898 = vmatprep.mubr.f32.mxu0 0.0
  %899 = vmatmul.mubr.f32.gmra.mxu0 %v691
  %v900 = vpop.f32.mrf.mxu0
  %v901 = vadd.f32 %v762, %v900
  %v902 = vpop.f32.mrf.mxu0
  %903 = vmatprep.mubr.f32.mxu0 0.0
  %904 = vmatmul.mubr.f32.gmra.mxu0 %v692
  %v905 = vpop.f32.mrf.mxu0
  %v906 = vadd.f32 %v762, %v905
  %v907 = vpop.f32.mrf.mxu0
  %908 = vmatprep.mubr.f32.mxu0 0.0
  %909 = vmatmul.mubr.f32.gmra.mxu0 %v693
  %v910 = vpop.f32.mrf.mxu0
  %v911 = vadd.f32 %v762, %v910
  %v912 = vpop.f32.mrf.mxu0
  %913 = vmatprep.mubr.f32.mxu0 0.0
  %914 = vmatmul.mubr.f32.gmra.mxu0 %v694
  %v915 = vpop.f32.mrf.mxu0
  %v916 = vadd.f32 %v762, %v915
  %v917 = vpop.f32.mrf.mxu0
  %918 = vmatprep.mubr.f32.mxu0 0.0
  %919 = vmatmul.mubr.f32.gmra.mxu0 %v695
  %v920 = vpop.f32.mrf.mxu0
  %v921 = vadd.f32 %v762, %v920
  %v922 = vpop.f32.mrf.mxu0
  %923 = vmatprep.mubr.f32.mxu0 0.0
  %924 = vmatmul.mubr.f32.gmra.mxu0 %v696
  %v925 = vpop.f32.mrf.mxu0
  %v926 = vadd.f32 %v762, %v925
  %v927 = vpop.f32.mrf.mxu0
  %928 = vmatprep.mubr.f32.mxu0 0.0
  %929 = vmatmul.mubr.f32.gmra.mxu0 %v697
  %v930 = vpop.f32.mrf.mxu0
  %v931 = vadd.f32 %v762, %v930
  %v932 = vpop.f32.mrf.mxu0
  %933 = vmatprep.mubr.f32.mxu0 0.0
  %934 = vmatmul.mubr.f32.gmra.mxu0 %v698
  %v935 = vpop.f32.mrf.mxu0
  %v936 = vadd.f32 %v762, %v935
  %v937 = vpop.f32.mrf.mxu0
  %938 = vmatprep.mubr.f32.mxu0 0.0
  %939 = vmatmul.mubr.f32.gmra.mxu0 %v699
  %v940 = vpop.f32.mrf.mxu0
  %v941 = vadd.f32 %v762, %v940
  %v942 = vpop.f32.mrf.mxu0
  %943 = vmatprep.mubr.f32.mxu0 0.0
  %944 = vmatmul.mubr.f32.gmra.mxu0 %v700
  %v945 = vpop.f32.mrf.mxu0
  %v946 = vadd.f32 %v762, %v945
  %v947 = vpop.f32.mrf.mxu0
  %948 = vmatprep.mubr.f32.mxu0 0.0
  %949 = vmatmul.mubr.f32.gmra.mxu0 %v701
  %v950 = vpop.f32.mrf.mxu0
  %v951 = vadd.f32 %v762, %v950
  %v952 = vpop.f32.mrf.mxu0
  %953 = vmatprep.mubr.f32.mxu0 0.0
  %954 = vmatmul.mubr.f32.gmra.mxu0 %v702
  %v955 = vpop.f32.mrf.mxu0
  %v956 = vadd.f32 %v762, %v955
  %v957 = vpop.f32.mrf.mxu0
  %958 = vmatprep.mubr.f32.mxu0 0.0
  %959 = vmatmul.mubr.f32.gmra.mxu0 %v703
  %v960 = vpop.f32.mrf.mxu0
  %v961 = vadd.f32 %v762, %v960
  %v962 = vpop.f32.mrf.mxu0
  %963 = vmatprep.mubr.f32.mxu0 0.0
  %964 = vmatmul.mubr.f32.gmra.mxu0 %v704
  %v965 = vpop.f32.mrf.mxu0
  %v966 = vadd.f32 %v762, %v965
  %v967 = vpop.f32.mrf.mxu0
  %968 = vmatprep.mubr.f32.mxu0 0.0
  %969 = vmatmul.mubr.f32.gmra.mxu0 %v705
  %v970 = vpop.f32.mrf.mxu0
  %v971 = vadd.f32 %v762, %v970
  %v972 = vpop.f32.mrf.mxu0
  %973 = vmatprep.mubr.f32.mxu0 0.0
  %974 = vmatmul.mubr.f32.gmra.mxu0 %v706
  %v975 = vpop.f32.mrf.mxu0
  %v976 = vadd.f32 %v762, %v975
  %v977 = vpop.f32.mrf.mxu0
  %978 = vmatprep.mubr.f32.mxu0 0.0
  %979 = vmatmul.mubr.f32.gmra.mxu0 %v707
  %v980 = vpop.f32.mrf.mxu0
  %v981 = vadd.f32 %v762, %v980
  %v982 = vpop.f32.mrf.mxu0
  %983 = vmatprep.mubr.f32.mxu0 0.0
  %984 = vmatmul.mubr.f32.gmra.mxu0 %v708
  %v985 = vpop.f32.mrf.mxu0
  %v986 = vadd.f32 %v762, %v985
  %v987 = vpop.f32.mrf.mxu0
  %988 = vmatprep.mubr.f32.mxu0 0.0
  %989 = vmatmul.mubr.f32.gmra.mxu0 %v709
  %v990 = vpop.f32.mrf.mxu0
  %v991 = vadd.f32 %v762, %v990
  %v992 = vpop.f32.mrf.mxu0
  %993 = vmatprep.mubr.f32.mxu0 0.0
  %994 = vmatmul.mubr.f32.gmra.mxu0 %v710
  %v995 = vpop.f32.mrf.mxu0
  %v996 = vadd.f32 %v762, %v995
  %v997 = vpop.f32.mrf.mxu0
  %998 = vmatprep.mubr.f32.mxu0 0.0
  %999 = vmatmul.mubr.f32.gmra.mxu0 %v711
  %v1000 = vpop.f32.mrf.mxu0
  %v1001 = vadd.f32 %v762, %v1000
  %v1002 = vpop.f32.mrf.mxu0
  %1003 = vmatprep.mubr.f32.mxu0 0.0
  %1004 = vmatmul.mubr.f32.gmra.mxu0 %v712
  %v1005 = vpop.f32.mrf.mxu0
  %v1006 = vadd.f32 %v762, %v1005
  %v1007 = vpop.f32.mrf.mxu0
  %1008 = vmatprep.mubr.f32.mxu0 0.0
  %1009 = vmatmul.mubr.f32.gmra.mxu0 %v713
  %v1010 = vpop.f32.mrf.mxu0
  %v1011 = vadd.f32 %v762, %v1010
  %v1012 = vpop.f32.mrf.mxu0
  %1013 = vmatprep.mubr.f32.mxu0 0.0
  %1014 = vmatmul.mubr.f32.gmra.mxu0 %v714
  %v1015 = vpop.f32.mrf.mxu0
  %v1016 = vadd.f32 %v762, %v1015
  %v1017 = vpop.f32.mrf.mxu0
  %1018 = vmatprep.mubr.f32.mxu0 0.0
  %1019 = vmatmul.mubr.f32.gmra.mxu0 %v715
  %v1020 = vpop.f32.mrf.mxu0
  %v1021 = vadd.f32 %v762, %v1020
  %v1022 = vpop.f32.mrf.mxu0
  %1023 = vmatprep.mubr.f32.mxu0 0.0
  %1024 = vmatmul.mubr.f32.gmra.mxu0 %v716
  %v1025 = vpop.f32.mrf.mxu0
  %v1026 = vadd.f32 %v762, %v1025
  %v1027 = vpop.f32.mrf.mxu0
  %1028 = vmatprep.mubr.f32.mxu0 0.0
  %1029 = vmatmul.mubr.f32.gmra.mxu0 %v717
  %v1030 = vpop.f32.mrf.mxu0
  %v1031 = vadd.f32 %v762, %v1030
  %v1032 = vpop.f32.mrf.mxu0
  %1033 = vmatprep.mubr.f32.mxu0 0.0
  %1034 = vmatmul.mubr.f32.gmra.mxu0 %v718
  %v1035 = vpop.f32.mrf.mxu0
  %v1036 = vadd.f32 %v762, %v1035
  %v1037 = vpop.f32.mrf.mxu0
  %1038 = vmatprep.mubr.f32.mxu0 0.0
  %1039 = vmatmul.mubr.f32.gmra.mxu0 %v719
  %v1040 = vpop.f32.mrf.mxu0
  %v1041 = vadd.f32 %v762, %v1040
  %v1042 = vpop.f32.mrf.mxu0
  %1043 = vmatprep.mubr.f32.mxu0 0.0
  %1044 = vmatmul.mubr.f32.gmra.mxu0 %v720
  %v1045 = vpop.f32.mrf.mxu0
  %v1046 = vadd.f32 %v762, %v1045
  %v1047 = vpop.f32.mrf.mxu0
  %1048 = vmatprep.mubr.f32.mxu0 0.0
  %1049 = vmatmul.mubr.f32.gmra.mxu0 %v721
  %v1050 = vpop.f32.mrf.mxu0
  %v1051 = vadd.f32 %v762, %v1050
  %v1052 = vpop.f32.mrf.mxu0
  %1053 = vmatprep.mubr.f32.mxu0 0.0
  %1054 = vmatmul.mubr.f32.gmra.mxu0 %v722
  %v1055 = vpop.f32.mrf.mxu0
  %v1056 = vadd.f32 %v762, %v1055
  %v1057 = vpop.f32.mrf.mxu0
  %1058 = vmatprep.mubr.f32.mxu0 0.0
  %1059 = vmatmul.mubr.f32.gmra.mxu0 %v723
  %v1060 = vpop.f32.mrf.mxu0
  %v1061 = vadd.f32 %v762, %v1060
  %v1062 = vpop.f32.mrf.mxu0
  %1063 = vmatprep.mubr.f32.mxu0 0.0
  %1064 = vmatmul.mubr.f32.gmra.mxu0 %v724
  %v1065 = vpop.f32.mrf.mxu0
  %v1066 = vadd.f32 %v762, %v1065
  %v1067 = vpop.f32.mrf.mxu0
  %1068 = vmatprep.mubr.f32.mxu0 0.0
  %1069 = vmatmul.mubr.f32.gmra.mxu0 %v725
  %v1070 = vpop.f32.mrf.mxu0
  %v1071 = vadd.f32 %v762, %v1070
  %v1072 = vpop.f32.mrf.mxu0
  %1073 = vmatprep.mubr.f32.mxu0 0.0
  %1074 = vmatmul.mubr.f32.gmra.mxu0 %v726
  %v1075 = vpop.f32.mrf.mxu0
  %v1076 = vadd.f32 %v762, %v1075
  %v1077 = vpop.f32.mrf.mxu0
  %1078 = vmatprep.mubr.f32.mxu0 0.0
  %1079 = vmatmul.mubr.f32.gmra.mxu0 %v727
  %v1080 = vpop.f32.mrf.mxu0
  %v1081 = vadd.f32 %v762, %v1080
  %v1082 = vpop.f32.mrf.mxu0
  %1083 = vmatprep.mubr.f32.mxu0 0.0
  %1084 = vmatmul.mubr.f32.gmra.mxu0 %v728
  %v1085 = vpop.f32.mrf.mxu0
  %v1086 = vadd.f32 %v762, %v1085
  %v1087 = vpop.f32.mrf.mxu0
  %1088 = vmatprep.mubr.f32.mxu0 0.0
  %1089 = vmatmul.mubr.f32.gmra.mxu0 %v729
  %v1090 = vpop.f32.mrf.mxu0
  %v1091 = vadd.f32 %v762, %v1090
  %v1092 = vpop.f32.mrf.mxu0
  %1093 = vmatprep.mubr.f32.mxu0 0.0
  %1094 = vmatmul.mubr.f32.gmra.mxu0 %v730
  %v1095 = vpop.f32.mrf.mxu0
  %v1096 = vadd.f32 %v762, %v1095
  %v1097 = vpop.f32.mrf.mxu0
  %1098 = vmatprep.mubr.f32.mxu0 0.0
  %1099 = vmatmul.mubr.f32.gmra.mxu0 %v731
  %v1100 = vpop.f32.mrf.mxu0
  %v1101 = vadd.f32 %v762, %v1100
  %v1102 = vpop.f32.mrf.mxu0
  %1103 = vmatprep.mubr.f32.mxu0 0.0
  %1104 = vmatmul.mubr.f32.gmra.mxu0 %v732
  %v1105 = vpop.f32.mrf.mxu0
  %v1106 = vadd.f32 %v762, %v1105
  %v1107 = vpop.f32.mrf.mxu0
  %1108 = vmatprep.mubr.f32.mxu0 0.0
  %1109 = vmatmul.mubr.f32.gmra.mxu0 %v733
  %v1110 = vpop.f32.mrf.mxu0
  %v1111 = vadd.f32 %v762, %v1110
  %v1112 = vpop.f32.mrf.mxu0
  %1113 = vmatprep.mubr.f32.mxu0 0.0
  %1114 = vmatmul.mubr.f32.gmra.mxu0 %v734
  %v1115 = vpop.f32.mrf.mxu0
  %v1116 = vadd.f32 %v762, %v1115
  %v1117 = vpop.f32.mrf.mxu0
  %1118 = vmatprep.mubr.f32.mxu0 0.0
  %1119 = vmatmul.mubr.f32.gmra.mxu0 %v735
  %v1120 = vpop.f32.mrf.mxu0
  %v1121 = vadd.f32 %v762, %v1120
  %v1122 = vpop.f32.mrf.mxu0
  %1123 = vmatprep.mubr.f32.mxu0 0.0
  %1124 = vmatmul.mubr.f32.gmra.mxu0 %v736
  %v1125 = vpop.f32.mrf.mxu0
  %v1126 = vadd.f32 %v762, %v1125
  %v1127 = vpop.f32.mrf.mxu0
  %1128 = vmatprep.mubr.f32.mxu0 0.0
  %1129 = vmatmul.mubr.f32.gmra.mxu0 %v737
  %v1130 = vpop.f32.mrf.mxu0
  %v1131 = vadd.f32 %v762, %v1130
  %v1132 = vpop.f32.mrf.mxu0
  %1133 = vmatprep.mubr.f32.mxu0 0.0
  %1134 = vmatmul.mubr.f32.gmra.mxu0 %v738
  %v1135 = vpop.f32.mrf.mxu0
  %v1136 = vadd.f32 %v762, %v1135
  %v1137 = vpop.f32.mrf.mxu0
  %1138 = vmatprep.mubr.f32.mxu0 0.0
  %1139 = vmatmul.mubr.f32.gmra.mxu0 %v739
  %v1140 = vpop.f32.mrf.mxu0
  %v1141 = vadd.f32 %v762, %v1140
  %v1142 = vpop.f32.mrf.mxu0
  %1143 = vmatprep.mubr.f32.mxu0 0.0
  %1144 = vmatmul.mubr.f32.gmra.mxu0 %v740
  %v1145 = vpop.f32.mrf.mxu0
  %v1146 = vadd.f32 %v762, %v1145
  %v1147 = vpop.f32.mrf.mxu0
  %1148 = vdwg.mxu0
  %v1149 = vmax.f32 %v831, 0.0
  %v1150 = vmax.f32 %v836, 0.0
  %v1151 = vmax.f32 %v841, 0.0
  %v1152 = vmax.f32 %v846, 0.0
  %v1153 = vmax.f32 %v851, 0.0
  %v1154 = vmax.f32 %v856, 0.0
  %v1155 = vmax.f32 %v861, 0.0
  %v1156 = vmax.f32 %v866, 0.0
  %v1157 = vmax.f32 %v871, 0.0
  %v1158 = vmax.f32 %v876, 0.0
  %v1159 = vmax.f32 %v881, 0.0
  %v1160 = vmax.f32 %v886, 0.0
  %v1161 = vmax.f32 %v891, 0.0
  %v1162 = vmax.f32 %v896, 0.0
  %v1163 = vmax.f32 %v901, 0.0
  %v1164 = vmax.f32 %v906, 0.0
  %v1165 = vmax.f32 %v911, 0.0
  %v1166 = vmax.f32 %v916, 0.0
  %v1167 = vmax.f32 %v921, 0.0
  %v1168 = vmax.f32 %v926, 0.0
  %v1169 = vmax.f32 %v931, 0.0
  %v1170 = vmax.f32 %v936, 0.0
  %v1171 = vmax.f32 %v941, 0.0
  %v1172 = vmax.f32 %v946, 0.0
  %v1173 = vmax.f32 %v951, 0.0
  %v1174 = vmax.f32 %v956, 0.0
  %v1175 = vmax.f32 %v961, 0.0
  %v1176 = vmax.f32 %v966, 0.0
  %v1177 = vmax.f32 %v971, 0.0
  %v1178 = vmax.f32 %v976, 0.0
  %v1179 = vmax.f32 %v981, 0.0
  %v1180 = vmax.f32 %v986, 0.0
  %v1181 = vmax.f32 %v991, 0.0
  %v1182 = vmax.f32 %v996, 0.0
  %v1183 = vmax.f32 %v1001, 0.0
  %v1184 = vmax.f32 %v1006, 0.0
  %v1185 = vmax.f32 %v1011, 0.0
  %v1186 = vmax.f32 %v1016, 0.0
  %v1187 = vmax.f32 %v1021, 0.0
  %v1188 = vmax.f32 %v1026, 0.0
  %v1189 = vmax.f32 %v1031, 0.0
  %v1190 = vmax.f32 %v1036, 0.0
  %v1191 = vmax.f32 %v1041, 0.0
  %v1192 = vmax.f32 %v1046, 0.0
  %v1193 = vmax.f32 %v1051, 0.0
  %v1194 = vmax.f32 %v1056, 0.0
  %v1195 = vmax.f32 %v1061, 0.0
  %v1196 = vmax.f32 %v1066, 0.0
  %v1197 = vmax.f32 %v1071, 0.0
  %v1198 = vmax.f32 %v1076, 0.0
  %v1199 = vmax.f32 %v1081, 0.0
  %v1200 = vmax.f32 %v1086, 0.0
  %v1201 = vmax.f32 %v1091, 0.0
  %v1202 = vmax.f32 %v1096, 0.0
  %v1203 = vmax.f32 %v1101, 0.0
  %v1204 = vmax.f32 %v1106, 0.0
  %v1205 = vmax.f32 %v1111, 0.0
  %v1206 = vmax.f32 %v1116, 0.0
  %v1207 = vmax.f32 %v1121, 0.0
  %v1208 = vmax.f32 %v1126, 0.0
  %v1209 = vmax.f32 %v1131, 0.0
  %v1210 = vmax.f32 %v1136, 0.0
  %v1211 = vmax.f32 %v1141, 0.0
  %v1212 = vmax.f32 %v1146, 0.0
  %v1213 = vld [vmem:[%s5] sm:$0xff]
  %v1214 = vld [vmem:[%s5 + $0x8] sm:$0xff]
  %v1215 = vld [vmem:[%s5 + $0x10] sm:$0xff]
  %v1216 = vld [vmem:[%s5 + $0x18] sm:$0xff]
  %v1217 = vld [vmem:[%s5 + $0x20] sm:$0xff]
  %v1218 = vld [vmem:[%s5 + $0x28] sm:$0xff]
  %v1219 = vld [vmem:[%s5 + $0x30] sm:$0xff]
  %v1220 = vld [vmem:[%s5 + $0x38] sm:$0xff]
  %v1221 = vld [vmem:[%s5 + $0x40] sm:$0xff]
  %v1222 = vld [vmem:[%s5 + $0x48] sm:$0xff]
  %v1223 = vld [vmem:[%s5 + $0x50] sm:$0xff]
  %v1224 = vld [vmem:[%s5 + $0x58] sm:$0xff]
  %v1225 = vld [vmem:[%s5 + $0x60] sm:$0xff]
  %v1226 = vld [vmem:[%s5 + $0x68] sm:$0xff]
  %v1227 = vld [vmem:[%s5 + $0x70] sm:$0xff]
  %v1228 = vld [vmem:[%s5 + $0x78] sm:$0xff]
  %v1229 = vld [vmem:[%s6] sm:$0x1]
  %v1231 = vlaneseq
  %v1232 = vshrl.u32 %v1231, 7
  %v1233 = vsub.s32 0, %v1232
  %v1234 = vrot.slane %v1229, %v1233
  %1236 = vmatprep.subr.mxu0 0.0
  %1237 = vmatpush1.msra.mxu0 %v1228
  %1238 = vmatprep.subr.mxu0 0.0
  %1239 = vmatpush1.msra.mxu0 %v1227
  %1240 = vmatprep.subr.mxu0 0.0
  %1241 = vmatpush1.msra.mxu0 %v1226
  %1242 = vmatprep.subr.mxu0 0.0
  %1243 = vmatpush1.msra.mxu0 %v1225
  %1244 = vmatprep.subr.mxu0 0.0
  %1245 = vmatpush1.msra.mxu0 %v1224
  %1246 = vmatprep.subr.mxu0 0.0
  %1247 = vmatpush1.msra.mxu0 %v1223
  %1248 = vmatprep.subr.mxu0 0.0
  %1249 = vmatpush1.msra.mxu0 %v1222
  %1250 = vmatprep.subr.mxu0 0.0
  %1251 = vmatpush1.msra.mxu0 %v1221
  %1252 = vmatprep.subr.mxu0 0.0
  %1253 = vmatpush1.msra.mxu0 %v1220
  %1254 = vmatprep.subr.mxu0 0.0
  %1255 = vmatpush1.msra.mxu0 %v1219
  %1256 = vmatprep.subr.mxu0 0.0
  %1257 = vmatpush1.msra.mxu0 %v1218
  %1258 = vmatprep.subr.mxu0 0.0
  %1259 = vmatpush1.msra.mxu0 %v1217
  %1260 = vmatprep.subr.mxu0 0.0
  %1261 = vmatpush1.msra.mxu0 %v1216
  %1262 = vmatprep.subr.mxu0 0.0
  %1263 = vmatpush1.msra.mxu0 %v1215
  %1264 = vmatprep.subr.mxu0 0.0
  %1265 = vmatpush1.msra.mxu0 %v1214
  %1266 = vmatprep.subr.mxu0 0.0
  %1267 = vmatpush1.msra.mxu0 %v1213
  %1268 = vmatprep.subr.mxu0 0.0
  %1269 = vmatpush2.msra.mxu0 0.0
  %1270 = vmatprep.subr.mxu0 0.0
  %1271 = vmatpush2.msra.mxu0 0.0
  %1272 = vmatprep.subr.mxu0 0.0
  %1273 = vmatpush2.msra.mxu0 0.0
  %1274 = vmatprep.subr.mxu0 0.0
  %1275 = vmatpush2.msra.mxu0 0.0
  %1276 = vmatprep.subr.mxu0 0.0
  %1277 = vmatpush2.msra.mxu0 0.0
  %1278 = vmatprep.subr.mxu0 0.0
  %1279 = vmatpush2.msra.mxu0 0.0
  %1280 = vmatprep.subr.mxu0 0.0
  %1281 = vmatpush2.msra.mxu0 0.0
  %1282 = vmatprep.subr.mxu0 0.0
  %1283 = vmatpush2.msra.mxu0 0.0
  %1284 = vmatprep.subr.mxu0 0.0
  %1285 = vmatpush2.msra.mxu0 0.0
  %1286 = vmatprep.subr.mxu0 0.0
  %1287 = vmatpush2.msra.mxu0 0.0
  %1288 = vmatprep.subr.mxu0 0.0
  %1289 = vmatpush2.msra.mxu0 0.0
  %1290 = vmatprep.subr.mxu0 0.0
  %1291 = vmatpush2.msra.mxu0 0.0
  %1292 = vmatprep.subr.mxu0 0.0
  %1293 = vmatpush2.msra.mxu0 0.0
  %1294 = vmatprep.subr.mxu0 0.0
  %1295 = vmatpush2.msra.mxu0 0.0
  %1296 = vmatprep.subr.mxu0 0.0
  %1297 = vmatpush2.msra.mxu0 0.0
  %1298 = vmatprep.subr.mxu0 0.0
  %1299 = vmatpush2.msra.mxu0 0.0
  %1300 = vmatprep.mubr.f32.mxu0 0.0
  %1301 = vmatmul.mubr.f32.gmra.mxu0 %v1149
  %v1302 = vpop.f32.mrf.mxu0
  %v1303 = vadd.f32 %v1234, %v1302
  %v1304 = vpop.f32.mrf.mxu0
  %1305 = vmatprep.mubr.f32.mxu0 0.0
  %1306 = vmatmul.mubr.f32.gmra.mxu0 %v1150
  %v1307 = vpop.f32.mrf.mxu0
  %v1308 = vadd.f32 %v1234, %v1307
  %v1309 = vpop.f32.mrf.mxu0
  %1310 = vmatprep.mubr.f32.mxu0 0.0
  %1311 = vmatmul.mubr.f32.gmra.mxu0 %v1151
  %v1312 = vpop.f32.mrf.mxu0
  %v1313 = vadd.f32 %v1234, %v1312
  %v1314 = vpop.f32.mrf.mxu0
  %1315 = vmatprep.mubr.f32.mxu0 0.0
  %1316 = vmatmul.mubr.f32.gmra.mxu0 %v1152
  %v1317 = vpop.f32.mrf.mxu0
  %v1318 = vadd.f32 %v1234, %v1317
  %v1319 = vpop.f32.mrf.mxu0
  %1320 = vmatprep.mubr.f32.mxu0 0.0
  %1321 = vmatmul.mubr.f32.gmra.mxu0 %v1153
  %v1322 = vpop.f32.mrf.mxu0
  %v1323 = vadd.f32 %v1234, %v1322
  %v1324 = vpop.f32.mrf.mxu0
  %1325 = vmatprep.mubr.f32.mxu0 0.0
  %1326 = vmatmul.mubr.f32.gmra.mxu0 %v1154
  %v1327 = vpop.f32.mrf.mxu0
  %v1328 = vadd.f32 %v1234, %v1327
  %v1329 = vpop.f32.mrf.mxu0
  %1330 = vmatprep.mubr.f32.mxu0 0.0
  %1331 = vmatmul.mubr.f32.gmra.mxu0 %v1155
  %v1332 = vpop.f32.mrf.mxu0
  %v1333 = vadd.f32 %v1234, %v1332
  %v1334 = vpop.f32.mrf.mxu0
  %1335 = vmatprep.mubr.f32.mxu0 0.0
  %1336 = vmatmul.mubr.f32.gmra.mxu0 %v1156
  %v1337 = vpop.f32.mrf.mxu0
  %v1338 = vadd.f32 %v1234, %v1337
  %v1339 = vpop.f32.mrf.mxu0
  %1340 = vmatprep.mubr.f32.mxu0 0.0
  %1341 = vmatmul.mubr.f32.gmra.mxu0 %v1157
  %v1342 = vpop.f32.mrf.mxu0
  %v1343 = vadd.f32 %v1234, %v1342
  %v1344 = vpop.f32.mrf.mxu0
  %1345 = vmatprep.mubr.f32.mxu0 0.0
  %1346 = vmatmul.mubr.f32.gmra.mxu0 %v1158
  %v1347 = vpop.f32.mrf.mxu0
  %v1348 = vadd.f32 %v1234, %v1347
  %v1349 = vpop.f32.mrf.mxu0
  %1350 = vmatprep.mubr.f32.mxu0 0.0
  %1351 = vmatmul.mubr.f32.gmra.mxu0 %v1159
  %v1352 = vpop.f32.mrf.mxu0
  %v1353 = vadd.f32 %v1234, %v1352
  %v1354 = vpop.f32.mrf.mxu0
  %1355 = vmatprep.mubr.f32.mxu0 0.0
  %1356 = vmatmul.mubr.f32.gmra.mxu0 %v1160
  %v1357 = vpop.f32.mrf.mxu0
  %v1358 = vadd.f32 %v1234, %v1357
  %v1359 = vpop.f32.mrf.mxu0
  %1360 = vmatprep.mubr.f32.mxu0 0.0
  %1361 = vmatmul.mubr.f32.gmra.mxu0 %v1161
  %v1362 = vpop.f32.mrf.mxu0
  %v1363 = vadd.f32 %v1234, %v1362
  %v1364 = vpop.f32.mrf.mxu0
  %1365 = vmatprep.mubr.f32.mxu0 0.0
  %1366 = vmatmul.mubr.f32.gmra.mxu0 %v1162
  %v1367 = vpop.f32.mrf.mxu0
  %v1368 = vadd.f32 %v1234, %v1367
  %v1369 = vpop.f32.mrf.mxu0
  %1370 = vmatprep.mubr.f32.mxu0 0.0
  %1371 = vmatmul.mubr.f32.gmra.mxu0 %v1163
  %v1372 = vpop.f32.mrf.mxu0
  %v1373 = vadd.f32 %v1234, %v1372
  %v1374 = vpop.f32.mrf.mxu0
  %1375 = vmatprep.mubr.f32.mxu0 0.0
  %1376 = vmatmul.mubr.f32.gmra.mxu0 %v1164
  %v1377 = vpop.f32.mrf.mxu0
  %v1378 = vadd.f32 %v1234, %v1377
  %v1379 = vpop.f32.mrf.mxu0
  %1380 = vmatprep.mubr.f32.mxu0 0.0
  %1381 = vmatmul.mubr.f32.gmra.mxu0 %v1165
  %v1382 = vpop.f32.mrf.mxu0
  %v1383 = vadd.f32 %v1234, %v1382
  %v1384 = vpop.f32.mrf.mxu0
  %1385 = vmatprep.mubr.f32.mxu0 0.0
  %1386 = vmatmul.mubr.f32.gmra.mxu0 %v1166
  %v1387 = vpop.f32.mrf.mxu0
  %v1388 = vadd.f32 %v1234, %v1387
  %v1389 = vpop.f32.mrf.mxu0
  %1390 = vmatprep.mubr.f32.mxu0 0.0
  %1391 = vmatmul.mubr.f32.gmra.mxu0 %v1167
  %v1392 = vpop.f32.mrf.mxu0
  %v1393 = vadd.f32 %v1234, %v1392
  %v1394 = vpop.f32.mrf.mxu0
  %1395 = vmatprep.mubr.f32.mxu0 0.0
  %1396 = vmatmul.mubr.f32.gmra.mxu0 %v1168
  %v1397 = vpop.f32.mrf.mxu0
  %v1398 = vadd.f32 %v1234, %v1397
  %v1399 = vpop.f32.mrf.mxu0
  %1400 = vmatprep.mubr.f32.mxu0 0.0
  %1401 = vmatmul.mubr.f32.gmra.mxu0 %v1169
  %v1402 = vpop.f32.mrf.mxu0
  %v1403 = vadd.f32 %v1234, %v1402
  %v1404 = vpop.f32.mrf.mxu0
  %1405 = vmatprep.mubr.f32.mxu0 0.0
  %1406 = vmatmul.mubr.f32.gmra.mxu0 %v1170
  %v1407 = vpop.f32.mrf.mxu0
  %v1408 = vadd.f32 %v1234, %v1407
  %v1409 = vpop.f32.mrf.mxu0
  %1410 = vmatprep.mubr.f32.mxu0 0.0
  %1411 = vmatmul.mubr.f32.gmra.mxu0 %v1171
  %v1412 = vpop.f32.mrf.mxu0
  %v1413 = vadd.f32 %v1234, %v1412
  %v1414 = vpop.f32.mrf.mxu0
  %1415 = vmatprep.mubr.f32.mxu0 0.0
  %1416 = vmatmul.mubr.f32.gmra.mxu0 %v1172
  %v1417 = vpop.f32.mrf.mxu0
  %v1418 = vadd.f32 %v1234, %v1417
  %v1419 = vpop.f32.mrf.mxu0
  %1420 = vmatprep.mubr.f32.mxu0 0.0
  %1421 = vmatmul.mubr.f32.gmra.mxu0 %v1173
  %v1422 = vpop.f32.mrf.mxu0
  %v1423 = vadd.f32 %v1234, %v1422
  %v1424 = vpop.f32.mrf.mxu0
  %1425 = vmatprep.mubr.f32.mxu0 0.0
  %1426 = vmatmul.mubr.f32.gmra.mxu0 %v1174
  %v1427 = vpop.f32.mrf.mxu0
  %v1428 = vadd.f32 %v1234, %v1427
  %v1429 = vpop.f32.mrf.mxu0
  %1430 = vmatprep.mubr.f32.mxu0 0.0
  %1431 = vmatmul.mubr.f32.gmra.mxu0 %v1175
  %v1432 = vpop.f32.mrf.mxu0
  %v1433 = vadd.f32 %v1234, %v1432
  %v1434 = vpop.f32.mrf.mxu0
  %1435 = vmatprep.mubr.f32.mxu0 0.0
  %1436 = vmatmul.mubr.f32.gmra.mxu0 %v1176
  %v1437 = vpop.f32.mrf.mxu0
  %v1438 = vadd.f32 %v1234, %v1437
  %v1439 = vpop.f32.mrf.mxu0
  %1440 = vmatprep.mubr.f32.mxu0 0.0
  %1441 = vmatmul.mubr.f32.gmra.mxu0 %v1177
  %v1442 = vpop.f32.mrf.mxu0
  %v1443 = vadd.f32 %v1234, %v1442
  %v1444 = vpop.f32.mrf.mxu0
  %1445 = vmatprep.mubr.f32.mxu0 0.0
  %1446 = vmatmul.mubr.f32.gmra.mxu0 %v1178
  %v1447 = vpop.f32.mrf.mxu0
  %v1448 = vadd.f32 %v1234, %v1447
  %v1449 = vpop.f32.mrf.mxu0
  %1450 = vmatprep.mubr.f32.mxu0 0.0
  %1451 = vmatmul.mubr.f32.gmra.mxu0 %v1179
  %v1452 = vpop.f32.mrf.mxu0
  %v1453 = vadd.f32 %v1234, %v1452
  %v1454 = vpop.f32.mrf.mxu0
  %1455 = vmatprep.mubr.f32.mxu0 0.0
  %1456 = vmatmul.mubr.f32.gmra.mxu0 %v1180
  %v1457 = vpop.f32.mrf.mxu0
  %v1458 = vadd.f32 %v1234, %v1457
  %v1459 = vpop.f32.mrf.mxu0
  %1460 = vmatprep.mubr.f32.mxu0 0.0
  %1461 = vmatmul.mubr.f32.gmra.mxu0 %v1181
  %v1462 = vpop.f32.mrf.mxu0
  %v1463 = vadd.f32 %v1234, %v1462
  %v1464 = vpop.f32.mrf.mxu0
  %1465 = vmatprep.mubr.f32.mxu0 0.0
  %1466 = vmatmul.mubr.f32.gmra.mxu0 %v1182
  %v1467 = vpop.f32.mrf.mxu0
  %v1468 = vadd.f32 %v1234, %v1467
  %v1469 = vpop.f32.mrf.mxu0
  %1470 = vmatprep.mubr.f32.mxu0 0.0
  %1471 = vmatmul.mubr.f32.gmra.mxu0 %v1183
  %v1472 = vpop.f32.mrf.mxu0
  %v1473 = vadd.f32 %v1234, %v1472
  %v1474 = vpop.f32.mrf.mxu0
  %1475 = vmatprep.mubr.f32.mxu0 0.0
  %1476 = vmatmul.mubr.f32.gmra.mxu0 %v1184
  %v1477 = vpop.f32.mrf.mxu0
  %v1478 = vadd.f32 %v1234, %v1477
  %v1479 = vpop.f32.mrf.mxu0
  %1480 = vmatprep.mubr.f32.mxu0 0.0
  %1481 = vmatmul.mubr.f32.gmra.mxu0 %v1185
  %v1482 = vpop.f32.mrf.mxu0
  %v1483 = vadd.f32 %v1234, %v1482
  %v1484 = vpop.f32.mrf.mxu0
  %1485 = vmatprep.mubr.f32.mxu0 0.0
  %1486 = vmatmul.mubr.f32.gmra.mxu0 %v1186
  %v1487 = vpop.f32.mrf.mxu0
  %v1488 = vadd.f32 %v1234, %v1487
  %v1489 = vpop.f32.mrf.mxu0
  %1490 = vmatprep.mubr.f32.mxu0 0.0
  %1491 = vmatmul.mubr.f32.gmra.mxu0 %v1187
  %v1492 = vpop.f32.mrf.mxu0
  %v1493 = vadd.f32 %v1234, %v1492
  %v1494 = vpop.f32.mrf.mxu0
  %1495 = vmatprep.mubr.f32.mxu0 0.0
  %1496 = vmatmul.mubr.f32.gmra.mxu0 %v1188
  %v1497 = vpop.f32.mrf.mxu0
  %v1498 = vadd.f32 %v1234, %v1497
  %v1499 = vpop.f32.mrf.mxu0
  %1500 = vmatprep.mubr.f32.mxu0 0.0
  %1501 = vmatmul.mubr.f32.gmra.mxu0 %v1189
  %v1502 = vpop.f32.mrf.mxu0
  %v1503 = vadd.f32 %v1234, %v1502
  %v1504 = vpop.f32.mrf.mxu0
  %1505 = vmatprep.mubr.f32.mxu0 0.0
  %1506 = vmatmul.mubr.f32.gmra.mxu0 %v1190
  %v1507 = vpop.f32.mrf.mxu0
  %v1508 = vadd.f32 %v1234, %v1507
  %v1509 = vpop.f32.mrf.mxu0
  %1510 = vmatprep.mubr.f32.mxu0 0.0
  %1511 = vmatmul.mubr.f32.gmra.mxu0 %v1191
  %v1512 = vpop.f32.mrf.mxu0
  %v1513 = vadd.f32 %v1234, %v1512
  %v1514 = vpop.f32.mrf.mxu0
  %1515 = vmatprep.mubr.f32.mxu0 0.0
  %1516 = vmatmul.mubr.f32.gmra.mxu0 %v1192
  %v1517 = vpop.f32.mrf.mxu0
  %v1518 = vadd.f32 %v1234, %v1517
  %v1519 = vpop.f32.mrf.mxu0
  %1520 = vmatprep.mubr.f32.mxu0 0.0
  %1521 = vmatmul.mubr.f32.gmra.mxu0 %v1193
  %v1522 = vpop.f32.mrf.mxu0
  %v1523 = vadd.f32 %v1234, %v1522
  %v1524 = vpop.f32.mrf.mxu0
  %1525 = vmatprep.mubr.f32.mxu0 0.0
  %1526 = vmatmul.mubr.f32.gmra.mxu0 %v1194
  %v1527 = vpop.f32.mrf.mxu0
  %v1528 = vadd.f32 %v1234, %v1527
  %v1529 = vpop.f32.mrf.mxu0
  %1530 = vmatprep.mubr.f32.mxu0 0.0
  %1531 = vmatmul.mubr.f32.gmra.mxu0 %v1195
  %v1532 = vpop.f32.mrf.mxu0
  %v1533 = vadd.f32 %v1234, %v1532
  %v1534 = vpop.f32.mrf.mxu0
  %1535 = vmatprep.mubr.f32.mxu0 0.0
  %1536 = vmatmul.mubr.f32.gmra.mxu0 %v1196
  %v1537 = vpop.f32.mrf.mxu0
  %v1538 = vadd.f32 %v1234, %v1537
  %v1539 = vpop.f32.mrf.mxu0
  %1540 = vmatprep.mubr.f32.mxu0 0.0
  %1541 = vmatmul.mubr.f32.gmra.mxu0 %v1197
  %v1542 = vpop.f32.mrf.mxu0
  %v1543 = vadd.f32 %v1234, %v1542
  %v1544 = vpop.f32.mrf.mxu0
  %1545 = vmatprep.mubr.f32.mxu0 0.0
  %1546 = vmatmul.mubr.f32.gmra.mxu0 %v1198
  %v1547 = vpop.f32.mrf.mxu0
  %v1548 = vadd.f32 %v1234, %v1547
  %v1549 = vpop.f32.mrf.mxu0
  %1550 = vmatprep.mubr.f32.mxu0 0.0
  %1551 = vmatmul.mubr.f32.gmra.mxu0 %v1199
  %v1552 = vpop.f32.mrf.mxu0
  %v1553 = vadd.f32 %v1234, %v1552
  %v1554 = vpop.f32.mrf.mxu0
  %1555 = vmatprep.mubr.f32.mxu0 0.0
  %1556 = vmatmul.mubr.f32.gmra.mxu0 %v1200
  %v1557 = vpop.f32.mrf.mxu0
  %v1558 = vadd.f32 %v1234, %v1557
  %v1559 = vpop.f32.mrf.mxu0
  %1560 = vmatprep.mubr.f32.mxu0 0.0
  %1561 = vmatmul.mubr.f32.gmra.mxu0 %v1201
  %v1562 = vpop.f32.mrf.mxu0
  %v1563 = vadd.f32 %v1234, %v1562
  %v1564 = vpop.f32.mrf.mxu0
  %1565 = vmatprep.mubr.f32.mxu0 0.0
  %1566 = vmatmul.mubr.f32.gmra.mxu0 %v1202
  %v1567 = vpop.f32.mrf.mxu0
  %v1568 = vadd.f32 %v1234, %v1567
  %v1569 = vpop.f32.mrf.mxu0
  %1570 = vmatprep.mubr.f32.mxu0 0.0
  %1571 = vmatmul.mubr.f32.gmra.mxu0 %v1203
  %v1572 = vpop.f32.mrf.mxu0
  %v1573 = vadd.f32 %v1234, %v1572
  %v1574 = vpop.f32.mrf.mxu0
  %1575 = vmatprep.mubr.f32.mxu0 0.0
  %1576 = vmatmul.mubr.f32.gmra.mxu0 %v1204
  %v1577 = vpop.f32.mrf.mxu0
  %v1578 = vadd.f32 %v1234, %v1577
  %v1579 = vpop.f32.mrf.mxu0
  %1580 = vmatprep.mubr.f32.mxu0 0.0
  %1581 = vmatmul.mubr.f32.gmra.mxu0 %v1205
  %v1582 = vpop.f32.mrf.mxu0
  %v1583 = vadd.f32 %v1234, %v1582
  %v1584 = vpop.f32.mrf.mxu0
  %1585 = vmatprep.mubr.f32.mxu0 0.0
  %1586 = vmatmul.mubr.f32.gmra.mxu0 %v1206
  %v1587 = vpop.f32.mrf.mxu0
  %v1588 = vadd.f32 %v1234, %v1587
  %v1589 = vpop.f32.mrf.mxu0
  %1590 = vmatprep.mubr.f32.mxu0 0.0
  %1591 = vmatmul.mubr.f32.gmra.mxu0 %v1207
  %v1592 = vpop.f32.mrf.mxu0
  %v1593 = vadd.f32 %v1234, %v1592
  %v1594 = vpop.f32.mrf.mxu0
  %1595 = vmatprep.mubr.f32.mxu0 0.0
  %1596 = vmatmul.mubr.f32.gmra.mxu0 %v1208
  %v1597 = vpop.f32.mrf.mxu0
  %v1598 = vadd.f32 %v1234, %v1597
  %v1599 = vpop.f32.mrf.mxu0
  %1600 = vmatprep.mubr.f32.mxu0 0.0
  %1601 = vmatmul.mubr.f32.gmra.mxu0 %v1209
  %v1602 = vpop.f32.mrf.mxu0
  %v1603 = vadd.f32 %v1234, %v1602
  %v1604 = vpop.f32.mrf.mxu0
  %1605 = vmatprep.mubr.f32.mxu0 0.0
  %1606 = vmatmul.mubr.f32.gmra.mxu0 %v1210
  %v1607 = vpop.f32.mrf.mxu0
  %v1608 = vadd.f32 %v1234, %v1607
  %v1609 = vpop.f32.mrf.mxu0
  %1610 = vmatprep.mubr.f32.mxu0 0.0
  %1611 = vmatmul.mubr.f32.gmra.mxu0 %v1211
  %v1612 = vpop.f32.mrf.mxu0
  %v1613 = vadd.f32 %v1234, %v1612
  %v1614 = vpop.f32.mrf.mxu0
  %1615 = vmatprep.mubr.f32.mxu0 0.0
  %1616 = vmatmul.mubr.f32.gmra.mxu0 %v1212
  %v1617 = vpop.f32.mrf.mxu0
  %v1618 = vadd.f32 %v1234, %v1617
  %v1619 = vpop.f32.mrf.mxu0
  %1620 = vdwg.mxu0
  %vm1621 = vcmask 31744
  %1622 = vst.msk [vmem:[%s7] sm:$0xff] %vm1621, %v1303
  %1623 = vst.msk [vmem:[%s7 + $0x8] sm:$0xff] %vm1621, %v1308
  %1624 = vst.msk [vmem:[%s7 + $0x10] sm:$0xff] %vm1621, %v1313
  %1625 = vst.msk [vmem:[%s7 + $0x18] sm:$0xff] %vm1621, %v1318
  %1626 = vst.msk [vmem:[%s7 + $0x20] sm:$0xff] %vm1621, %v1323
  %1627 = vst.msk [vmem:[%s7 + $0x28] sm:$0xff] %vm1621, %v1328
  %1628 = vst.msk [vmem:[%s7 + $0x30] sm:$0xff] %vm1621, %v1333
  %1629 = vst.msk [vmem:[%s7 + $0x38] sm:$0xff] %vm1621, %v1338
  %1630 = vst.msk [vmem:[%s7 + $0x40] sm:$0xff] %vm1621, %v1343
  %1631 = vst.msk [vmem:[%s7 + $0x48] sm:$0xff] %vm1621, %v1348
  %1632 = vst.msk [vmem:[%s7 + $0x50] sm:$0xff] %vm1621, %v1353
  %1633 = vst.msk [vmem:[%s7 + $0x58] sm:$0xff] %vm1621, %v1358
  %1634 = vst.msk [vmem:[%s7 + $0x60] sm:$0xff] %vm1621, %v1363
  %1635 = vst.msk [vmem:[%s7 + $0x68] sm:$0xff] %vm1621, %v1368
  %1636 = vst.msk [vmem:[%s7 + $0x70] sm:$0xff] %vm1621, %v1373
  %1637 = vst.msk [vmem:[%s7 + $0x78] sm:$0xff] %vm1621, %v1378
  %1638 = vst.msk [vmem:[%s7 + $0x80] sm:$0xff] %vm1621, %v1383
  %1639 = vst.msk [vmem:[%s7 + $0x88] sm:$0xff] %vm1621, %v1388
  %1640 = vst.msk [vmem:[%s7 + $0x90] sm:$0xff] %vm1621, %v1393
  %1641 = vst.msk [vmem:[%s7 + $0x98] sm:$0xff] %vm1621, %v1398
  %1642 = vst.msk [vmem:[%s7 + $0xa0] sm:$0xff] %vm1621, %v1403
  %1643 = vst.msk [vmem:[%s7 + $0xa8] sm:$0xff] %vm1621, %v1408
  %1644 = vst.msk [vmem:[%s7 + $0xb0] sm:$0xff] %vm1621, %v1413
  %1645 = vst.msk [vmem:[%s7 + $0xb8] sm:$0xff] %vm1621, %v1418
  %1646 = vst.msk [vmem:[%s7 + $0xc0] sm:$0xff] %vm1621, %v1423
  %1647 = vst.msk [vmem:[%s7 + $0xc8] sm:$0xff] %vm1621, %v1428
  %1648 = vst.msk [vmem:[%s7 + $0xd0] sm:$0xff] %vm1621, %v1433
  %1649 = vst.msk [vmem:[%s7 + $0xd8] sm:$0xff] %vm1621, %v1438
  %1650 = vst.msk [vmem:[%s7 + $0xe0] sm:$0xff] %vm1621, %v1443
  %1651 = vst.msk [vmem:[%s7 + $0xe8] sm:$0xff] %vm1621, %v1448
  %1652 = vst.msk [vmem:[%s7 + $0xf0] sm:$0xff] %vm1621, %v1453
  %1653 = vst.msk [vmem:[%s7 + $0xf8] sm:$0xff] %vm1621, %v1458
  %1654 = vst.msk [vmem:[%s7 + $0x100] sm:$0xff] %vm1621, %v1463
  %1655 = vst.msk [vmem:[%s7 + $0x108] sm:$0xff] %vm1621, %v1468
  %1656 = vst.msk [vmem:[%s7 + $0x110] sm:$0xff] %vm1621, %v1473
  %1657 = vst.msk [vmem:[%s7 + $0x118] sm:$0xff] %vm1621, %v1478
  %1658 = vst.msk [vmem:[%s7 + $0x120] sm:$0xff] %vm1621, %v1483
  %1659 = vst.msk [vmem:[%s7 + $0x128] sm:$0xff] %vm1621, %v1488
  %1660 = vst.msk [vmem:[%s7 + $0x130] sm:$0xff] %vm1621, %v1493
  %1661 = vst.msk [vmem:[%s7 + $0x138] sm:$0xff] %vm1621, %v1498
  %1662 = vst.msk [vmem:[%s7 + $0x140] sm:$0xff] %vm1621, %v1503
  %1663 = vst.msk [vmem:[%s7 + $0x148] sm:$0xff] %vm1621, %v1508
  %1664 = vst.msk [vmem:[%s7 + $0x150] sm:$0xff] %vm1621, %v1513
  %1665 = vst.msk [vmem:[%s7 + $0x158] sm:$0xff] %vm1621, %v1518
  %1666 = vst.msk [vmem:[%s7 + $0x160] sm:$0xff] %vm1621, %v1523
  %1667 = vst.msk [vmem:[%s7 + $0x168] sm:$0xff] %vm1621, %v1528
  %1668 = vst.msk [vmem:[%s7 + $0x170] sm:$0xff] %vm1621, %v1533
  %1669 = vst.msk [vmem:[%s7 + $0x178] sm:$0xff] %vm1621, %v1538
  %1670 = vst.msk [vmem:[%s7 + $0x180] sm:$0xff] %vm1621, %v1543
  %1671 = vst.msk [vmem:[%s7 + $0x188] sm:$0xff] %vm1621, %v1548
  %1672 = vst.msk [vmem:[%s7 + $0x190] sm:$0xff] %vm1621, %v1553
  %1673 = vst.msk [vmem:[%s7 + $0x198] sm:$0xff] %vm1621, %v1558
  %1674 = vst.msk [vmem:[%s7 + $0x1a0] sm:$0xff] %vm1621, %v1563
  %1675 = vst.msk [vmem:[%s7 + $0x1a8] sm:$0xff] %vm1621, %v1568
  %1676 = vst.msk [vmem:[%s7 + $0x1b0] sm:$0xff] %vm1621, %v1573
  %1677 = vst.msk [vmem:[%s7 + $0x1b8] sm:$0xff] %vm1621, %v1578
  %1678 = vst.msk [vmem:[%s7 + $0x1c0] sm:$0xff] %vm1621, %v1583
  %1679 = vst.msk [vmem:[%s7 + $0x1c8] sm:$0xff] %vm1621, %v1588
  %1680 = vst.msk [vmem:[%s7 + $0x1d0] sm:$0xff] %vm1621, %v1593
  %1681 = vst.msk [vmem:[%s7 + $0x1d8] sm:$0xff] %vm1621, %v1598
  %1682 = vst.msk [vmem:[%s7 + $0x1e0] sm:$0xff] %vm1621, %v1603
  %1683 = vst.msk [vmem:[%s7 + $0x1e8] sm:$0xff] %vm1621, %v1608
  %1684 = vst.msk [vmem:[%s7 + $0x1f0] sm:$0xff] %vm1621, %v1613
  %1685 = vst.msk [vmem:[%s7 + $0x1f8] sm:$0xff] %vm1621, %v1618
  // Predicated region
  $region30: #{dqn_forward.1} parent=0 // pred_check
    _
  $region31: #{dqn_forward.1} parent=0 // pred_check_branch
    %1687 = sbr.rel (0) target = $region33
  $region32: #{dqn_forward.1} parent=0 // pred_region
    _
  $region33: #{dqn_forward.1} parent=0 // pred_fallthru
    _
  // Predicated region
  $region34: #{dqn_forward.1} parent=0 // pred_check
    _
  $region35: #{dqn_forward.1} parent=0 // pred_check_branch
    %1689 = sbr.rel (0) target = $region37
  $region36: #{dqn_forward.1} parent=0 // pred_region
    _
  $region37: #{dqn_forward.1} parent=0 // pred_fallthru
    _

</llo_original>
